<compile_context>
chip_gen: v6e
topology: v6e:2x2x1
jax: 0.10.0
libtpu: 0.0.40
codegen_flags: <defaults>
</compile_context>

<pallas_src>
import jax
import jax.numpy as jnp
from jax.experimental import pallas as pl
from jax.experimental.pallas import tpu as pltpu  # noqa: F401  (no TPU-specific params needed at these sizes)

# ---- problem sizes (small, consistent with the module) ----
B = 2        # batch
N = 16       # number of points (feat1 / xyz1)
S = 8        # number of sampled points (feat2 / xyz2)
C1 = 32      # feat1_dim  (channels of points1)
C2 = 32      # feat2_dim  (channels of points2)
D_MODEL = 32
OUT_DIM = 32
NHEAD = 2
HEAD_DIM = D_MODEL // NHEAD
LN_EPS = 1e-5     # nn.LayerNorm default eps
ATTN_EPS = 1e-6   # LinearAttention eps


def _elu1(x):
    # F.elu(x, alpha=1) + 1
    return jnp.where(x > 0, x + 1.0, jnp.exp(x))


def fp_sa_kernel(p1_ref, p2_ref, xyz2_ref, wa_ref, wb_ref, vp_ref, out_ref):
    f32 = jnp.float32
    wa = wa_ref[...]          # [32, 128]  = [wq | wk | wv | wmerge]
    wb = wb_ref[...]          # [64, 128]  = [w1 | w2 | (pos_w2 ; head_mask)]
    vp = vp_ref[...]          # [16, 32]   = pos_w1 rows + bias/gamma/beta rows

    wq     = wa[:,   0:32]
    wk     = wa[:,  32:64]
    wvp    = wa[:,  64:96]
    wmerge = wa[:,  96:128]

    w1a    = wb[0:32,   0:64]      # mlp[0] weight, feat1 half
    w1b    = wb[32:64,  0:64]      # mlp[0] weight, message half
    w2     = wb[:,     64:96]      # mlp[2] weight
    pos_w2 = wb[0:32,  96:128]     # pos_mlp2 second Linear
    hmask  = wb[32:64, 96:128]     # block-diagonal head mask (NHEAD blocks of HEAD_DIM)

    pos_b1 = vp[3:4, :]
    pos_b2 = vp[4:5, :]
    g1     = vp[5:6, :]
    b1     = vp[6:7, :]
    g2     = vp[7:8, :]
    b2     = vp[8:9, :]

    msgs = []
    x1as = []
    for b in range(B):                 # static unroll over batch (folded into one grid step)
        x1 = p1_ref[b]                 # [C1, N]  channels-first
        x2 = p2_ref[b]                 # [C2, S]  channels-first
        xyz = xyz2_ref[b]              # [S, 3]

        # pos_mlp2: Linear(3, d_model) -> ReLU -> Linear(d_model, feat2_dim).
        # First layer on the VPU: K=3 contraction done as 3 broadcast FMAs (no MXU).
        h = (xyz[:, 0:1] * vp[0:1, :]
             + xyz[:, 1:2] * vp[1:2, :]
             + xyz[:, 2:3] * vp[2:3, :]
             + pos_b1)
        h = jnp.maximum(h, 0.0)
        pos = jnp.dot(h, pos_w2, preferred_element_type=f32) + pos_b2        # [S, C2]

        # q/k/v projections straight from the channels-first inputs
        # (trans-A contraction == (x.T) @ W, no explicit transpose materialized)
        q = jnp.einsum('cn,cd->nd', x1, wq, preferred_element_type=f32)      # [N, d]
        k = jnp.einsum('cs,cd->sd', x2, wk, preferred_element_type=f32)      # [S, d]
        v = (jnp.einsum('cs,cd->sd', x2, wvp, preferred_element_type=f32)
             + jnp.dot(pos, wvp, preferred_element_type=f32))                # (feat2+pos) @ wv

        Q = _elu1(q)
        K = _elu1(k)
        V = v * (1.0 / S)              # v_length normalization in LinearAttention

        # Full-width linear attention (all heads at once, block-diagonal mask keeps
        # per-head semantics exact):  KV = K^T V  masked;  msg = Q KV / (Q Ksum) * S
        KV = jnp.einsum('sd,se->de', K, V, preferred_element_type=f32) * hmask   # [d, d]
        ksum = jnp.sum(K, axis=0, keepdims=True)                                  # [1, d]
        numer = jnp.dot(Q, KV, preferred_element_type=f32)                        # [N, d]
        denom = jnp.dot(Q * ksum, hmask, preferred_element_type=f32) + ATTN_EPS   # [N, d]
        msgs.append(numer * (float(S) / denom))

        # feat1 half of mlp[0] (split matmul replaces cat([feat1, message], dim=-1))
        x1as.append(jnp.einsum('cn,ck->nk', x1, w1a, preferred_element_type=f32))  # [N, 2d]

    message = jnp.concatenate(msgs, axis=0)      # [B*N, d]   (sublane-axis concat)
    x1a = jnp.concatenate(x1as, axis=0)          # [B*N, 2d]

    # merge + LayerNorm(d_model)
    m = jnp.dot(message, wmerge, preferred_element_type=f32)
    mu = jnp.mean(m, axis=-1, keepdims=True)
    var = jnp.mean(jnp.square(m - mu), axis=-1, keepdims=True)
    m = (m - mu) * jax.lax.rsqrt(var + LN_EPS) * g1 + b1

    # mlp: Linear(feat1_dim + d_model, 2d, bias=False) -> ReLU -> Linear(2d, out_dim, bias=False)
    hid = jnp.maximum(x1a + jnp.dot(m, w1b, preferred_element_type=f32), 0.0)   # [B*N, 2d]
    o = jnp.dot(hid, w2, preferred_element_type=f32)                            # [B*N, out]

    # LayerNorm(out_dim)
    mu2 = jnp.mean(o, axis=-1, keepdims=True)
    var2 = jnp.mean(jnp.square(o - mu2), axis=-1, keepdims=True)
    o = (o - mu2) * jax.lax.rsqrt(var2 + LN_EPS) * g2 + b2

    # emit channels-first [B, OUT_DIM, N] directly (output transpose fused into the kernel)
    oT = o.T.astype(out_ref.dtype)               # [OUT_DIM, B*N] (square [32,32] transpose)
    for b in range(B):
        out_ref[b] = oT[:, b * N:(b + 1) * N]


def make_params(key):
    ks = jax.random.split(key, 16)

    def w(k, shape, scale=0.05):
        return (scale * jax.random.normal(k, shape)).astype(jnp.float32)

    return dict(
        pos_w1=w(ks[0], (3, D_MODEL)),          # Linear(3, d_model) weight (transposed)
        pos_b1=w(ks[1], (1, D_MODEL)),
        pos_w2=w(ks[2], (D_MODEL, C2)),         # Linear(d_model, feat2_dim)
        pos_b2=w(ks[3], (1, C2)),
        wq=w(ks[4], (C1, D_MODEL)),             # q_proj (no bias)
        wk=w(ks[5], (C2, D_MODEL)),             # k_proj (no bias)
        wv=w(ks[6], (C2, D_MODEL)),             # v_proj (no bias)
        wmerge=w(ks[7], (D_MODEL, D_MODEL)),    # merge (no bias)
        g1=(1.0 + w(ks[8], (1, D_MODEL))),      # norm1 gamma
        b1=w(ks[9], (1, D_MODEL)),              # norm1 beta
        w1a=w(ks[10], (C1, 2 * D_MODEL)),       # mlp[0] weight, feat1 half
        w1b=w(ks[11], (D_MODEL, 2 * D_MODEL)),  # mlp[0] weight, message half
        w2=w(ks[12], (2 * D_MODEL, OUT_DIM)),   # mlp[2] weight
        g2=(1.0 + w(ks[13], (1, OUT_DIM))),     # norm2 gamma
        b2=w(ks[14], (1, OUT_DIM)),             # norm2 beta
    )


def pack_params(p):
    """One-time weight preprocessing: pack the 15 parameters into 3 slabs (3 DMAs/call)."""
    head_ids = jnp.arange(D_MODEL) // HEAD_DIM
    head_mask = (head_ids[:, None] == head_ids[None, :]).astype(jnp.float32)   # [d, d]

    wa = jnp.concatenate([p['wq'], p['wk'], p['wv'], p['wmerge']], axis=1)     # [32, 128]
    w1 = jnp.concatenate([p['w1a'], p['w1b']], axis=0)                         # [64, 64]
    aux = jnp.concatenate([p['pos_w2'], head_mask], axis=0)                    # [64, 32]
    wb = jnp.concatenate([w1, p['w2'], aux], axis=1)                           # [64, 128]
    vp = jnp.concatenate(
        [p['pos_w1'],                                                          # rows 0..2
         p['pos_b1'], p['pos_b2'], p['g1'], p['b1'], p['g2'], p['b2'],         # rows 3..8
         jnp.zeros((7, D_MODEL), jnp.float32)],                                # pad -> 16 rows
        axis=0)                                                                # [16, 32]
    return wa, wb, vp


def fp_sa_pallas(points1, xyz1, points2, xyz2, packed):
    """FP_SA.forward. points1 [B,C1,N], xyz1 [B,N,3] (unused), points2 [B,C2,S], xyz2 [B,S,3].
    Returns [B, OUT_DIM, N]. No wrapper-side transposes: exactly one XLA op (the pallas_call)."""
    del xyz1  # unused by FP_SA.forward
    wa, wb, vp = packed
    return pl.pallas_call(
        fp_sa_kernel,
        out_shape=jax.ShapeDtypeStruct((B, OUT_DIM, N), jnp.float32),
    )(points1, points2, xyz2, wa, wb, vp)


def fp_sa_ref(points1, xyz1, points2, xyz2, p):
    # pure-JAX reference of FP_SA.forward (mirrors the PyTorch module)
    del xyz1
    feat1 = jnp.transpose(points1, (0, 2, 1))
    feat2 = jnp.transpose(points2, (0, 2, 1))
    pos = jnp.maximum(xyz2 @ p['pos_w1'] + p['pos_b1'], 0.0) @ p['pos_w2'] + p['pos_b2']
    feat2_pos = feat2 + pos
    q = feat1 @ p['wq']
    k = feat2 @ p['wk']
    v = feat2_pos @ p['wv']
    Bq, Nq, _ = q.shape
    Sk = k.shape[1]
    Q = _elu1(q).reshape(Bq, Nq, NHEAD, HEAD_DIM)
    K = _elu1(k).reshape(Bq, Sk, NHEAD, HEAD_DIM)
    V = (v / Sk).reshape(Bq, Sk, NHEAD, HEAD_DIM)
    KV = jnp.einsum('bshd,bshv->bhdv', K, V)
    Z = 1.0 / (jnp.einsum('bnhd,bhd->bnh', Q, K.sum(axis=1)) + ATTN_EPS)
    msg = jnp.einsum('bnhd,bhdv,bnh->bnhv', Q, KV, Z) * Sk
    msg = msg.reshape(Bq, Nq, D_MODEL) @ p['wmerge']
    mu = msg.mean(-1, keepdims=True)
    var = ((msg - mu) ** 2).mean(-1, keepdims=True)
    msg = (msg - mu) / jnp.sqrt(var + LN_EPS) * p['g1'] + p['b1']
    x = jnp.concatenate([feat1, msg], axis=-1)
    w1 = jnp.concatenate([p['w1a'], p['w1b']], axis=0)
    h = jnp.maximum(x @ w1, 0.0)
    o = h @ p['w2']
    mu2 = o.mean(-1, keepdims=True)
    var2 = ((o - mu2) ** 2).mean(-1, keepdims=True)
    o = (o - mu2) / jnp.sqrt(var2 + LN_EPS) * p['g2'] + p['b2']
    return jnp.transpose(o, (0, 2, 1))


if __name__ == "__main__":
    key = jax.random.PRNGKey(0)
    k1, k2, k3, k4, kp = jax.random.split(key, 5)
    points1 = jax.random.normal(k1, (B, C1, N), jnp.float32)   # [B, D, N]
    points2 = jax.random.normal(k2, (B, C2, S), jnp.float32)   # [B, D, S]
    xyz1 = jax.random.normal(k3, (B, N, 3), jnp.float32)
    xyz2 = jax.random.normal(k4, (B, S, 3), jnp.float32)
    params = make_params(kp)
    packed = pack_params(params)                               # one-time weight packing

    out = fp_sa_pallas(points1, xyz1, points2, xyz2, packed)
    out = jax.block_until_ready(out)
    ref = fp_sa_ref(points1, xyz1, points2, xyz2, params)

    assert out.shape == (B, OUT_DIM, N), out.shape
    max_err = float(jnp.max(jnp.abs(out - ref)))
    assert jnp.allclose(out, ref, atol=1e-3, rtol=1e-3), f"max_err={max_err}"
    print("KERNEL_OK")
</pallas_src>

<mosaic_0001>
module attributes {stable_mosaic.version = 11 : i64} {
  func.func @fp_sa_kernel(%arg0: memref<2x32x16xf32, #tpu.memory_space<vmem>>, %arg1: memref<2x32x8xf32, #tpu.memory_space<vmem>>, %arg2: memref<2x8x3xf32, #tpu.memory_space<vmem>>, %arg3: memref<32x128xf32, #tpu.memory_space<vmem>>, %arg4: memref<64x128xf32, #tpu.memory_space<vmem>>, %arg5: memref<16x32xf32, #tpu.memory_space<vmem>>, %arg6: memref<2x32x16xf32, #tpu.memory_space<vmem>>) attributes {dimension_semantics = [], scalar_prefetch = 0 : i64, scratch_operands = 0 : i64, tpu.core_type = #tpu.core_type<tc>} {
    %c0 = arith.constant 0 : index
    %c0_0 = arith.constant 0 : index
    %0 = vector.load %arg3[%c0, %c0_0] : memref<32x128xf32, #tpu.memory_space<vmem>>, vector<32x128xf32>
    %c0_1 = arith.constant 0 : index
    %c0_2 = arith.constant 0 : index
    %1 = vector.load %arg4[%c0_1, %c0_2] : memref<64x128xf32, #tpu.memory_space<vmem>>, vector<64x128xf32>
    %c0_3 = arith.constant 0 : index
    %c0_4 = arith.constant 0 : index
    %2 = vector.load %arg5[%c0_3, %c0_4] : memref<16x32xf32, #tpu.memory_space<vmem>>, vector<16x32xf32>
    %3 = vector.extract_strided_slice %0 {offsets = [0, 0], sizes = [32, 32], strides = [1, 1]} : vector<32x128xf32> to vector<32x32xf32>
    %4 = vector.extract_strided_slice %0 {offsets = [0, 32], sizes = [32, 32], strides = [1, 1]} : vector<32x128xf32> to vector<32x32xf32>
    %5 = vector.extract_strided_slice %0 {offsets = [0, 64], sizes = [32, 32], strides = [1, 1]} : vector<32x128xf32> to vector<32x32xf32>
    %6 = vector.extract_strided_slice %0 {offsets = [0, 96], sizes = [32, 32], strides = [1, 1]} : vector<32x128xf32> to vector<32x32xf32>
    %7 = vector.extract_strided_slice %1 {offsets = [0, 0], sizes = [32, 64], strides = [1, 1]} : vector<64x128xf32> to vector<32x64xf32>
    %8 = vector.extract_strided_slice %1 {offsets = [32, 0], sizes = [32, 64], strides = [1, 1]} : vector<64x128xf32> to vector<32x64xf32>
    %9 = vector.extract_strided_slice %1 {offsets = [0, 64], sizes = [64, 32], strides = [1, 1]} : vector<64x128xf32> to vector<64x32xf32>
    %10 = vector.extract_strided_slice %1 {offsets = [0, 96], sizes = [32, 32], strides = [1, 1]} : vector<64x128xf32> to vector<32x32xf32>
    %11 = vector.extract_strided_slice %1 {offsets = [32, 96], sizes = [32, 32], strides = [1, 1]} : vector<64x128xf32> to vector<32x32xf32>
    %12 = vector.extract_strided_slice %2 {offsets = [3, 0], sizes = [1, 32], strides = [1, 1]} : vector<16x32xf32> to vector<1x32xf32>
    %13 = vector.extract_strided_slice %2 {offsets = [4, 0], sizes = [1, 32], strides = [1, 1]} : vector<16x32xf32> to vector<1x32xf32>
    %14 = vector.extract_strided_slice %2 {offsets = [5, 0], sizes = [1, 32], strides = [1, 1]} : vector<16x32xf32> to vector<1x32xf32>
    %15 = vector.extract_strided_slice %2 {offsets = [6, 0], sizes = [1, 32], strides = [1, 1]} : vector<16x32xf32> to vector<1x32xf32>
    %16 = vector.extract_strided_slice %2 {offsets = [7, 0], sizes = [1, 32], strides = [1, 1]} : vector<16x32xf32> to vector<1x32xf32>
    %17 = vector.extract_strided_slice %2 {offsets = [8, 0], sizes = [1, 32], strides = [1, 1]} : vector<16x32xf32> to vector<1x32xf32>
    %c0_5 = arith.constant 0 : index
    %c0_6 = arith.constant 0 : index
    %c0_7 = arith.constant 0 : index
    %18 = vector.load %arg0[%c0_5, %c0_6, %c0_7] : memref<2x32x16xf32, #tpu.memory_space<vmem>>, vector<1x32x16xf32>
    %19 = vector.shape_cast %18 : vector<1x32x16xf32> to vector<32x16xf32>
    %c0_8 = arith.constant 0 : index
    %c0_9 = arith.constant 0 : index
    %c0_10 = arith.constant 0 : index
    %20 = vector.load %arg1[%c0_8, %c0_9, %c0_10] : memref<2x32x8xf32, #tpu.memory_space<vmem>>, vector<1x32x8xf32>
    %21 = vector.shape_cast %20 : vector<1x32x8xf32> to vector<32x8xf32>
    %c0_11 = arith.constant 0 : index
    %c0_12 = arith.constant 0 : index
    %c0_13 = arith.constant 0 : index
    %22 = vector.load %arg2[%c0_11, %c0_12, %c0_13] : memref<2x8x3xf32, #tpu.memory_space<vmem>>, vector<1x8x3xf32>
    %23 = vector.shape_cast %22 : vector<1x8x3xf32> to vector<8x3xf32>
    %24 = vector.extract_strided_slice %23 {offsets = [0, 0], sizes = [8, 1], strides = [1, 1]} : vector<8x3xf32> to vector<8x1xf32>
    %25 = vector.extract_strided_slice %2 {offsets = [0, 0], sizes = [1, 32], strides = [1, 1]} : vector<16x32xf32> to vector<1x32xf32>
    %26 = vector.broadcast %24 : vector<8x1xf32> to vector<8x32xf32>
    %27 = vector.broadcast %25 : vector<1x32xf32> to vector<8x32xf32>
    %28 = arith.mulf %26, %27 : vector<8x32xf32>
    %29 = vector.extract_strided_slice %23 {offsets = [0, 1], sizes = [8, 1], strides = [1, 1]} : vector<8x3xf32> to vector<8x1xf32>
    %30 = vector.extract_strided_slice %2 {offsets = [1, 0], sizes = [1, 32], strides = [1, 1]} : vector<16x32xf32> to vector<1x32xf32>
    %31 = vector.broadcast %29 : vector<8x1xf32> to vector<8x32xf32>
    %32 = vector.broadcast %30 : vector<1x32xf32> to vector<8x32xf32>
    %33 = arith.mulf %31, %32 : vector<8x32xf32>
    %34 = arith.addf %28, %33 : vector<8x32xf32>
    %35 = vector.extract_strided_slice %23 {offsets = [0, 2], sizes = [8, 1], strides = [1, 1]} : vector<8x3xf32> to vector<8x1xf32>
    %36 = vector.extract_strided_slice %2 {offsets = [2, 0], sizes = [1, 32], strides = [1, 1]} : vector<16x32xf32> to vector<1x32xf32>
    %37 = vector.broadcast %35 : vector<8x1xf32> to vector<8x32xf32>
    %38 = vector.broadcast %36 : vector<1x32xf32> to vector<8x32xf32>
    %39 = arith.mulf %37, %38 : vector<8x32xf32>
    %40 = arith.addf %34, %39 : vector<8x32xf32>
    %41 = vector.broadcast %12 : vector<1x32xf32> to vector<8x32xf32>
    %42 = arith.addf %40, %41 : vector<8x32xf32>
    %cst = arith.constant 0.000000e+00 : f32
    %43 = vector.broadcast %cst : f32 to vector<8x32xf32>
    %44 = arith.maximumf %42, %43 : vector<8x32xf32>
    %cst_14 = arith.constant dense<0.000000e+00> : vector<8x32xf32>
    %45 = tpu.matmul %44, %10, %cst_14 {dimension_numbers = #tpu.dot_dimension_numbers<[1], [0], [0], [1], [0, 0, 1, 1], [], []>} : vector<8x32xf32>, vector<32x32xf32>, vector<8x32xf32> -> vector<8x32xf32>
    %46 = vector.broadcast %13 : vector<1x32xf32> to vector<8x32xf32>
    %47 = arith.addf %45, %46 : vector<8x32xf32>
    "tpu.trace_start"() <{level = 10 : i32, message = "cn,cd->nd"}> : () -> ()
    %cst_15 = arith.constant dense<0.000000e+00> : vector<16x32xf32>
    %48 = tpu.matmul %19, %3, %cst_15 {dimension_numbers = #tpu.dot_dimension_numbers<[0], [0], [1], [1], [0, 1, 1, 1], [], []>} : vector<32x16xf32>, vector<32x32xf32>, vector<16x32xf32> -> vector<16x32xf32>
    "tpu.trace_stop"() : () -> ()
    "tpu.trace_start"() <{level = 10 : i32, message = "cs,cd->sd"}> : () -> ()
    %cst_16 = arith.constant dense<0.000000e+00> : vector<8x32xf32>
    %49 = tpu.matmul %21, %4, %cst_16 {dimension_numbers = #tpu.dot_dimension_numbers<[0], [0], [1], [1], [0, 1, 1, 1], [], []>} : vector<32x8xf32>, vector<32x32xf32>, vector<8x32xf32> -> vector<8x32xf32>
    %cst_17 = arith.constant dense<0.000000e+00> : vector<8x32xf32>
    %50 = tpu.matmul %21, %5, %cst_17 {dimension_numbers = #tpu.dot_dimension_numbers<[0], [0], [1], [1], [0, 1, 1, 1], [], []>} : vector<32x8xf32>, vector<32x32xf32>, vector<8x32xf32> -> vector<8x32xf32>
    "tpu.trace_stop"() : () -> ()
    %cst_18 = arith.constant dense<0.000000e+00> : vector<8x32xf32>
    %51 = tpu.matmul %47, %5, %cst_18 {dimension_numbers = #tpu.dot_dimension_numbers<[1], [0], [0], [1], [0, 0, 1, 1], [], []>} : vector<8x32xf32>, vector<32x32xf32>, vector<8x32xf32> -> vector<8x32xf32>
    %52 = arith.addf %50, %51 : vector<8x32xf32>
    %cst_19 = arith.constant 0.000000e+00 : f32
    %53 = vector.broadcast %cst_19 : f32 to vector<16x32xf32>
    %54 = arith.cmpf ogt, %48, %53 : vector<16x32xf32>
    %cst_20 = arith.constant 1.000000e+00 : f32
    %55 = vector.broadcast %cst_20 : f32 to vector<16x32xf32>
    %56 = arith.addf %48, %55 : vector<16x32xf32>
    %57 = math.exp %48 : vector<16x32xf32>
    %58 = arith.select %54, %56, %57 : vector<16x32xi1>, vector<16x32xf32>
    %cst_21 = arith.constant 0.000000e+00 : f32
    %59 = vector.broadcast %cst_21 : f32 to vector<8x32xf32>
    %60 = arith.cmpf ogt, %49, %59 : vector<8x32xf32>
    %cst_22 = arith.constant 1.000000e+00 : f32
    %61 = vector.broadcast %cst_22 : f32 to vector<8x32xf32>
    %62 = arith.addf %49, %61 : vector<8x32xf32>
    %63 = math.exp %49 : vector<8x32xf32>
    %64 = arith.select %60, %62, %63 : vector<8x32xi1>, vector<8x32xf32>
    %cst_23 = arith.constant 1.250000e-01 : f32
    %65 = vector.broadcast %cst_23 : f32 to vector<8x32xf32>
    %66 = arith.mulf %52, %65 : vector<8x32xf32>
    "tpu.trace_start"() <{level = 10 : i32, message = "sd,se->de"}> : () -> ()
    %cst_24 = arith.constant dense<0.000000e+00> : vector<32x32xf32>
    %67 = tpu.matmul %64, %66, %cst_24 {dimension_numbers = #tpu.dot_dimension_numbers<[0], [0], [1], [1], [0, 1, 1, 1], [], []>} : vector<8x32xf32>, vector<8x32xf32>, vector<32x32xf32> -> vector<32x32xf32>
    "tpu.trace_stop"() : () -> ()
    %68 = arith.mulf %67, %11 : vector<32x32xf32>
    %cst_25 = arith.constant dense<0.000000e+00> : vector<32xf32>
    %69 = vector.multi_reduction <add>, %64, %cst_25 [0] : vector<8x32xf32> to vector<32xf32>
    %70 = vector.shape_cast %69 : vector<32xf32> to vector<1x32xf32>
    %cst_26 = arith.constant dense<0.000000e+00> : vector<16x32xf32>
    %71 = tpu.matmul %58, %68, %cst_26 {dimension_numbers = #tpu.dot_dimension_numbers<[1], [0], [0], [1], [0, 0, 1, 1], [], []>} : vector<16x32xf32>, vector<32x32xf32>, vector<16x32xf32> -> vector<16x32xf32>
    %72 = vector.broadcast %70 : vector<1x32xf32> to vector<16x32xf32>
    %73 = arith.mulf %58, %72 : vector<16x32xf32>
    %cst_27 = arith.constant dense<0.000000e+00> : vector<16x32xf32>
    %74 = tpu.matmul %73, %11, %cst_27 {dimension_numbers = #tpu.dot_dimension_numbers<[1], [0], [0], [1], [0, 0, 1, 1], [], []>} : vector<16x32xf32>, vector<32x32xf32>, vector<16x32xf32> -> vector<16x32xf32>
    %cst_28 = arith.constant 9.99999997E-7 : f32
    %75 = vector.broadcast %cst_28 : f32 to vector<16x32xf32>
    %76 = arith.addf %74, %75 : vector<16x32xf32>
    %cst_29 = arith.constant 8.000000e+00 : f32
    %77 = vector.broadcast %cst_29 : f32 to vector<16x32xf32>
    %78 = arith.divf %77, %76 : vector<16x32xf32>
    %79 = arith.mulf %71, %78 : vector<16x32xf32>
    "tpu.trace_start"() <{level = 10 : i32, message = "cn,ck->nk"}> : () -> ()
    %cst_30 = arith.constant dense<0.000000e+00> : vector<16x64xf32>
    %80 = tpu.matmul %19, %7, %cst_30 {dimension_numbers = #tpu.dot_dimension_numbers<[0], [0], [1], [1], [0, 1, 1, 1], [], []>} : vector<32x16xf32>, vector<32x64xf32>, vector<16x64xf32> -> vector<16x64xf32>
    "tpu.trace_stop"() : () -> ()
    %c1 = arith.constant 1 : index
    %c0_31 = arith.constant 0 : index
    %c0_32 = arith.constant 0 : index
    %81 = vector.load %arg0[%c1, %c0_31, %c0_32] : memref<2x32x16xf32, #tpu.memory_space<vmem>>, vector<1x32x16xf32>
    %82 = vector.shape_cast %81 : vector<1x32x16xf32> to vector<32x16xf32>
    %c1_33 = arith.constant 1 : index
    %c0_34 = arith.constant 0 : index
    %c0_35 = arith.constant 0 : index
    %83 = vector.load %arg1[%c1_33, %c0_34, %c0_35] : memref<2x32x8xf32, #tpu.memory_space<vmem>>, vector<1x32x8xf32>
    %84 = vector.shape_cast %83 : vector<1x32x8xf32> to vector<32x8xf32>
    %c1_36 = arith.constant 1 : index
    %c0_37 = arith.constant 0 : index
    %c0_38 = arith.constant 0 : index
    %85 = vector.load %arg2[%c1_36, %c0_37, %c0_38] : memref<2x8x3xf32, #tpu.memory_space<vmem>>, vector<1x8x3xf32>
    %86 = vector.shape_cast %85 : vector<1x8x3xf32> to vector<8x3xf32>
    %87 = vector.extract_strided_slice %86 {offsets = [0, 0], sizes = [8, 1], strides = [1, 1]} : vector<8x3xf32> to vector<8x1xf32>
    %88 = vector.extract_strided_slice %2 {offsets = [0, 0], sizes = [1, 32], strides = [1, 1]} : vector<16x32xf32> to vector<1x32xf32>
    %89 = vector.broadcast %87 : vector<8x1xf32> to vector<8x32xf32>
    %90 = vector.broadcast %88 : vector<1x32xf32> to vector<8x32xf32>
    %91 = arith.mulf %89, %90 : vector<8x32xf32>
    %92 = vector.extract_strided_slice %86 {offsets = [0, 1], sizes = [8, 1], strides = [1, 1]} : vector<8x3xf32> to vector<8x1xf32>
    %93 = vector.extract_strided_slice %2 {offsets = [1, 0], sizes = [1, 32], strides = [1, 1]} : vector<16x32xf32> to vector<1x32xf32>
    %94 = vector.broadcast %92 : vector<8x1xf32> to vector<8x32xf32>
    %95 = vector.broadcast %93 : vector<1x32xf32> to vector<8x32xf32>
    %96 = arith.mulf %94, %95 : vector<8x32xf32>
    %97 = arith.addf %91, %96 : vector<8x32xf32>
    %98 = vector.extract_strided_slice %86 {offsets = [0, 2], sizes = [8, 1], strides = [1, 1]} : vector<8x3xf32> to vector<8x1xf32>
    %99 = vector.extract_strided_slice %2 {offsets = [2, 0], sizes = [1, 32], strides = [1, 1]} : vector<16x32xf32> to vector<1x32xf32>
    %100 = vector.broadcast %98 : vector<8x1xf32> to vector<8x32xf32>
    %101 = vector.broadcast %99 : vector<1x32xf32> to vector<8x32xf32>
    %102 = arith.mulf %100, %101 : vector<8x32xf32>
    %103 = arith.addf %97, %102 : vector<8x32xf32>
    %104 = vector.broadcast %12 : vector<1x32xf32> to vector<8x32xf32>
    %105 = arith.addf %103, %104 : vector<8x32xf32>
    %cst_39 = arith.constant 0.000000e+00 : f32
    %106 = vector.broadcast %cst_39 : f32 to vector<8x32xf32>
    %107 = arith.maximumf %105, %106 : vector<8x32xf32>
    %cst_40 = arith.constant dense<0.000000e+00> : vector<8x32xf32>
    %108 = tpu.matmul %107, %10, %cst_40 {dimension_numbers = #tpu.dot_dimension_numbers<[1], [0], [0], [1], [0, 0, 1, 1], [], []>} : vector<8x32xf32>, vector<32x32xf32>, vector<8x32xf32> -> vector<8x32xf32>
    %109 = vector.broadcast %13 : vector<1x32xf32> to vector<8x32xf32>
    %110 = arith.addf %108, %109 : vector<8x32xf32>
    "tpu.trace_start"() <{level = 10 : i32, message = "cn,cd->nd"}> : () -> ()
    %cst_41 = arith.constant dense<0.000000e+00> : vector<16x32xf32>
    %111 = tpu.matmul %82, %3, %cst_41 {dimension_numbers = #tpu.dot_dimension_numbers<[0], [0], [1], [1], [0, 1, 1, 1], [], []>} : vector<32x16xf32>, vector<32x32xf32>, vector<16x32xf32> -> vector<16x32xf32>
    "tpu.trace_stop"() : () -> ()
    "tpu.trace_start"() <{level = 10 : i32, message = "cs,cd->sd"}> : () -> ()
    %cst_42 = arith.constant dense<0.000000e+00> : vector<8x32xf32>
    %112 = tpu.matmul %84, %4, %cst_42 {dimension_numbers = #tpu.dot_dimension_numbers<[0], [0], [1], [1], [0, 1, 1, 1], [], []>} : vector<32x8xf32>, vector<32x32xf32>, vector<8x32xf32> -> vector<8x32xf32>
    %cst_43 = arith.constant dense<0.000000e+00> : vector<8x32xf32>
    %113 = tpu.matmul %84, %5, %cst_43 {dimension_numbers = #tpu.dot_dimension_numbers<[0], [0], [1], [1], [0, 1, 1, 1], [], []>} : vector<32x8xf32>, vector<32x32xf32>, vector<8x32xf32> -> vector<8x32xf32>
    "tpu.trace_stop"() : () -> ()
    %cst_44 = arith.constant dense<0.000000e+00> : vector<8x32xf32>
    %114 = tpu.matmul %110, %5, %cst_44 {dimension_numbers = #tpu.dot_dimension_numbers<[1], [0], [0], [1], [0, 0, 1, 1], [], []>} : vector<8x32xf32>, vector<32x32xf32>, vector<8x32xf32> -> vector<8x32xf32>
    %115 = arith.addf %113, %114 : vector<8x32xf32>
    %cst_45 = arith.constant 0.000000e+00 : f32
    %116 = vector.broadcast %cst_45 : f32 to vector<16x32xf32>
    %117 = arith.cmpf ogt, %111, %116 : vector<16x32xf32>
    %cst_46 = arith.constant 1.000000e+00 : f32
    %118 = vector.broadcast %cst_46 : f32 to vector<16x32xf32>
    %119 = arith.addf %111, %118 : vector<16x32xf32>
    %120 = math.exp %111 : vector<16x32xf32>
    %121 = arith.select %117, %119, %120 : vector<16x32xi1>, vector<16x32xf32>
    %cst_47 = arith.constant 0.000000e+00 : f32
    %122 = vector.broadcast %cst_47 : f32 to vector<8x32xf32>
    %123 = arith.cmpf ogt, %112, %122 : vector<8x32xf32>
    %cst_48 = arith.constant 1.000000e+00 : f32
    %124 = vector.broadcast %cst_48 : f32 to vector<8x32xf32>
    %125 = arith.addf %112, %124 : vector<8x32xf32>
    %126 = math.exp %112 : vector<8x32xf32>
    %127 = arith.select %123, %125, %126 : vector<8x32xi1>, vector<8x32xf32>
    %cst_49 = arith.constant 1.250000e-01 : f32
    %128 = vector.broadcast %cst_49 : f32 to vector<8x32xf32>
    %129 = arith.mulf %115, %128 : vector<8x32xf32>
    "tpu.trace_start"() <{level = 10 : i32, message = "sd,se->de"}> : () -> ()
    %cst_50 = arith.constant dense<0.000000e+00> : vector<32x32xf32>
    %130 = tpu.matmul %127, %129, %cst_50 {dimension_numbers = #tpu.dot_dimension_numbers<[0], [0], [1], [1], [0, 1, 1, 1], [], []>} : vector<8x32xf32>, vector<8x32xf32>, vector<32x32xf32> -> vector<32x32xf32>
    "tpu.trace_stop"() : () -> ()
    %131 = arith.mulf %130, %11 : vector<32x32xf32>
    %cst_51 = arith.constant dense<0.000000e+00> : vector<32xf32>
    %132 = vector.multi_reduction <add>, %127, %cst_51 [0] : vector<8x32xf32> to vector<32xf32>
    %133 = vector.shape_cast %132 : vector<32xf32> to vector<1x32xf32>
    %cst_52 = arith.constant dense<0.000000e+00> : vector<16x32xf32>
    %134 = tpu.matmul %121, %131, %cst_52 {dimension_numbers = #tpu.dot_dimension_numbers<[1], [0], [0], [1], [0, 0, 1, 1], [], []>} : vector<16x32xf32>, vector<32x32xf32>, vector<16x32xf32> -> vector<16x32xf32>
    %135 = vector.broadcast %133 : vector<1x32xf32> to vector<16x32xf32>
    %136 = arith.mulf %121, %135 : vector<16x32xf32>
    %cst_53 = arith.constant dense<0.000000e+00> : vector<16x32xf32>
    %137 = tpu.matmul %136, %11, %cst_53 {dimension_numbers = #tpu.dot_dimension_numbers<[1], [0], [0], [1], [0, 0, 1, 1], [], []>} : vector<16x32xf32>, vector<32x32xf32>, vector<16x32xf32> -> vector<16x32xf32>
    %cst_54 = arith.constant 9.99999997E-7 : f32
    %138 = vector.broadcast %cst_54 : f32 to vector<16x32xf32>
    %139 = arith.addf %137, %138 : vector<16x32xf32>
    %cst_55 = arith.constant 8.000000e+00 : f32
    %140 = vector.broadcast %cst_55 : f32 to vector<16x32xf32>
    %141 = arith.divf %140, %139 : vector<16x32xf32>
    %142 = arith.mulf %134, %141 : vector<16x32xf32>
    "tpu.trace_start"() <{level = 10 : i32, message = "cn,ck->nk"}> : () -> ()
    %cst_56 = arith.constant dense<0.000000e+00> : vector<16x64xf32>
    %143 = tpu.matmul %82, %7, %cst_56 {dimension_numbers = #tpu.dot_dimension_numbers<[0], [0], [1], [1], [0, 1, 1, 1], [], []>} : vector<32x16xf32>, vector<32x64xf32>, vector<16x64xf32> -> vector<16x64xf32>
    "tpu.trace_stop"() : () -> ()
    %144 = tpu.concatenate %79, %142 in 0 : vector<16x32xf32>, vector<16x32xf32> -> vector<32x32xf32>
    %145 = tpu.concatenate %80, %143 in 0 : vector<16x64xf32>, vector<16x64xf32> -> vector<32x64xf32>
    %cst_57 = arith.constant dense<0.000000e+00> : vector<32x32xf32>
    %146 = tpu.matmul %144, %6, %cst_57 {dimension_numbers = #tpu.dot_dimension_numbers<[1], [0], [0], [1], [0, 0, 1, 1], [], []>} : vector<32x32xf32>, vector<32x32xf32>, vector<32x32xf32> -> vector<32x32xf32>
    %cst_58 = arith.constant dense<0.000000e+00> : vector<32xf32>
    %147 = vector.multi_reduction <add>, %146, %cst_58 [1] : vector<32x32xf32> to vector<32xf32>
    %148 = vector.shape_cast %147 : vector<32xf32> to vector<32x1xf32>
    %cst_59 = arith.constant 3.200000e+01 : f32
    %149 = vector.broadcast %cst_59 : f32 to vector<32x1xf32>
    %150 = arith.divf %148, %149 : vector<32x1xf32>
    %151 = vector.broadcast %150 : vector<32x1xf32> to vector<32x32xf32>
    %152 = arith.subf %146, %151 : vector<32x32xf32>
    %153 = arith.mulf %152, %152 : vector<32x32xf32>
    %cst_60 = arith.constant dense<0.000000e+00> : vector<32xf32>
    %154 = vector.multi_reduction <add>, %153, %cst_60 [1] : vector<32x32xf32> to vector<32xf32>
    %155 = vector.shape_cast %154 : vector<32xf32> to vector<32x1xf32>
    %cst_61 = arith.constant 3.200000e+01 : f32
    %156 = vector.broadcast %cst_61 : f32 to vector<32x1xf32>
    %157 = arith.divf %155, %156 : vector<32x1xf32>
    %158 = vector.broadcast %150 : vector<32x1xf32> to vector<32x32xf32>
    %159 = arith.subf %146, %158 : vector<32x32xf32>
    %cst_62 = arith.constant 9.99999974E-6 : f32
    %160 = vector.broadcast %cst_62 : f32 to vector<32x1xf32>
    %161 = arith.addf %157, %160 : vector<32x1xf32>
    %162 = math.rsqrt %161 : vector<32x1xf32>
    %163 = vector.broadcast %162 : vector<32x1xf32> to vector<32x32xf32>
    %164 = arith.mulf %159, %163 : vector<32x32xf32>
    %165 = vector.broadcast %14 : vector<1x32xf32> to vector<32x32xf32>
    %166 = arith.mulf %164, %165 : vector<32x32xf32>
    %167 = vector.broadcast %15 : vector<1x32xf32> to vector<32x32xf32>
    %168 = arith.addf %166, %167 : vector<32x32xf32>
    %cst_63 = arith.constant dense<0.000000e+00> : vector<32x64xf32>
    %169 = tpu.matmul %168, %8, %cst_63 {dimension_numbers = #tpu.dot_dimension_numbers<[1], [0], [0], [1], [0, 0, 1, 1], [], []>} : vector<32x32xf32>, vector<32x64xf32>, vector<32x64xf32> -> vector<32x64xf32>
    %170 = arith.addf %145, %169 : vector<32x64xf32>
    %cst_64 = arith.constant 0.000000e+00 : f32
    %171 = vector.broadcast %cst_64 : f32 to vector<32x64xf32>
    %172 = arith.maximumf %170, %171 : vector<32x64xf32>
    %cst_65 = arith.constant dense<0.000000e+00> : vector<32x32xf32>
    %173 = tpu.matmul %172, %9, %cst_65 {dimension_numbers = #tpu.dot_dimension_numbers<[1], [0], [0], [1], [0, 0, 1, 1], [], []>} : vector<32x64xf32>, vector<64x32xf32>, vector<32x32xf32> -> vector<32x32xf32>
    %cst_66 = arith.constant dense<0.000000e+00> : vector<32xf32>
    %174 = vector.multi_reduction <add>, %173, %cst_66 [1] : vector<32x32xf32> to vector<32xf32>
    %175 = vector.shape_cast %174 : vector<32xf32> to vector<32x1xf32>
    %cst_67 = arith.constant 3.200000e+01 : f32
    %176 = vector.broadcast %cst_67 : f32 to vector<32x1xf32>
    %177 = arith.divf %175, %176 : vector<32x1xf32>
    %178 = vector.broadcast %177 : vector<32x1xf32> to vector<32x32xf32>
    %179 = arith.subf %173, %178 : vector<32x32xf32>
    %180 = arith.mulf %179, %179 : vector<32x32xf32>
    %cst_68 = arith.constant dense<0.000000e+00> : vector<32xf32>
    %181 = vector.multi_reduction <add>, %180, %cst_68 [1] : vector<32x32xf32> to vector<32xf32>
    %182 = vector.shape_cast %181 : vector<32xf32> to vector<32x1xf32>
    %cst_69 = arith.constant 3.200000e+01 : f32
    %183 = vector.broadcast %cst_69 : f32 to vector<32x1xf32>
    %184 = arith.divf %182, %183 : vector<32x1xf32>
    %185 = vector.broadcast %177 : vector<32x1xf32> to vector<32x32xf32>
    %186 = arith.subf %173, %185 : vector<32x32xf32>
    %cst_70 = arith.constant 9.99999974E-6 : f32
    %187 = vector.broadcast %cst_70 : f32 to vector<32x1xf32>
    %188 = arith.addf %184, %187 : vector<32x1xf32>
    %189 = math.rsqrt %188 : vector<32x1xf32>
    %190 = vector.broadcast %189 : vector<32x1xf32> to vector<32x32xf32>
    %191 = arith.mulf %186, %190 : vector<32x32xf32>
    %192 = vector.broadcast %16 : vector<1x32xf32> to vector<32x32xf32>
    %193 = arith.mulf %191, %192 : vector<32x32xf32>
    %194 = vector.broadcast %17 : vector<1x32xf32> to vector<32x32xf32>
    %195 = arith.addf %193, %194 : vector<32x32xf32>
    %196 = tpu.transpose %195, [1, 0] : vector<32x32xf32> -> vector<32x32xf32>
    %197 = vector.extract_strided_slice %196 {offsets = [0, 0], sizes = [32, 16], strides = [1, 1]} : vector<32x32xf32> to vector<32x16xf32>
    %c0_71 = arith.constant 0 : index
    %c0_72 = arith.constant 0 : index
    %c0_73 = arith.constant 0 : index
    %198 = vector.load %arg6[%c0_71, %c0_72, %c0_73] : memref<2x32x16xf32, #tpu.memory_space<vmem>>, vector<1x32x16xf32>
    %199 = vector.shape_cast %198 : vector<1x32x16xf32> to vector<32x16xf32>
    %200 = vector.shape_cast %197 : vector<32x16xf32> to vector<1x32x16xf32>
    tpu.vector_store %arg6[%c0_71, %c0_72, %c0_73], %200 {strides = array<i32>} : memref<2x32x16xf32, #tpu.memory_space<vmem>>, vector<1x32x16xf32>,
    %201 = vector.extract_strided_slice %196 {offsets = [0, 16], sizes = [32, 16], strides = [1, 1]} : vector<32x32xf32> to vector<32x16xf32>
    %c1_74 = arith.constant 1 : index
    %c0_75 = arith.constant 0 : index
    %c0_76 = arith.constant 0 : index
    %202 = vector.load %arg6[%c1_74, %c0_75, %c0_76] : memref<2x32x16xf32, #tpu.memory_space<vmem>>, vector<1x32x16xf32>
    %203 = vector.shape_cast %202 : vector<1x32x16xf32> to vector<32x16xf32>
    %204 = vector.shape_cast %201 : vector<32x16xf32> to vector<1x32x16xf32>
    tpu.vector_store %arg6[%c1_74, %c0_75, %c0_76], %204 {strides = array<i32>} : memref<2x32x16xf32, #tpu.memory_space<vmem>>, vector<1x32x16xf32>,
    return
  }
}

</mosaic_0001>

<llo_original>
// kernel: tpu_custom_call.1
$region0: #{tpu_custom_call.1}
  #allocation0 [shape = 'u32[]', space=smem, size = 0x4, offset = 0x4, fixed_abs, tag = 'smem constant byte address 0x4 - core index']
  #allocation1 [shape = 'u32[144,128]{1,0:T(1,128)}', space=vmem, size = 0x12000, scoped, tag = 'internal scratch']
  %s0 = inlined_call_operand.vmem [shape: f32[2,32,16], index: 0, kind: input, shape index: {}]
  %s1 = inlined_call_operand.vmem [shape: f32[2,32,8], index: 1, kind: input, shape index: {}]
  %s2 = inlined_call_operand.vmem [shape: f32[2,8,3], index: 2, kind: input, shape index: {}]
  %s3 = inlined_call_operand.vmem [shape: f32[32,128], index: 3, kind: input, shape index: {}]
  %s4 = inlined_call_operand.vmem [shape: f32[64,128], index: 4, kind: input, shape index: {}]
  %s5 = inlined_call_operand.vmem [shape: f32[16,32], index: 5, kind: input, shape index: {}]
  %s6 = inlined_call_operand.vmem [shape: f32[2,32,16], index: 6, kind: output, shape index: {}]
  %s7 = sld [smem:[#allocation0]]
  $region34: #{tpu_custom_call.1} parent=0
    _
  %s9 = ssub.s32 1, %s7
  %s10 = scalar_select 0, %s9, %s7
  // Predicated region
  $region2: #{tpu_custom_call.1} parent=0 // pred_check
    _
  $region3: #{tpu_custom_call.1} parent=0 // pred_check_branch
    %12 = sbr.rel (0) target = $region5
  $region4: #{tpu_custom_call.1} parent=0 // pred_region
    _
  $region5: #{tpu_custom_call.1} parent=0 // pred_fallthru
    _
  // Predicated region
  $region6: #{tpu_custom_call.1} parent=0 // pred_check
    _
  $region7: #{tpu_custom_call.1} parent=0 // pred_check_branch
    %14 = sbr.rel (0) target = $region9
  $region8: #{tpu_custom_call.1} parent=0 // pred_region
    _
  $region9: #{tpu_custom_call.1} parent=0 // pred_fallthru
    _
  // Predicated region
  $region10: #{tpu_custom_call.1} parent=0 // pred_check
    _
  $region11: #{tpu_custom_call.1} parent=0 // pred_check_branch
    %16 = sbr.rel (0) target = $region13
  $region12: #{tpu_custom_call.1} parent=0 // pred_region
    _
  $region13: #{tpu_custom_call.1} parent=0 // pred_fallthru
    _
  // Predicated region
  $region14: #{tpu_custom_call.1} parent=0 // pred_check
    _
  $region15: #{tpu_custom_call.1} parent=0 // pred_check_branch
    %18 = sbr.rel (0) target = $region17
  $region16: #{tpu_custom_call.1} parent=0 // pred_region
    _
  $region17: #{tpu_custom_call.1} parent=0 // pred_fallthru
    _
  // Predicated region
  $region18: #{tpu_custom_call.1} parent=0 // pred_check
    _
  $region19: #{tpu_custom_call.1} parent=0 // pred_check_branch
    %20 = sbr.rel (0) target = $region21
  $region20: #{tpu_custom_call.1} parent=0 // pred_region
    _
  $region21: #{tpu_custom_call.1} parent=0 // pred_fallthru
    _
  // Predicated region
  $region22: #{tpu_custom_call.1} parent=0 // pred_check
    _
  $region23: #{tpu_custom_call.1} parent=0 // pred_check_branch
    %22 = sbr.rel (0) target = $region25
  $region24: #{tpu_custom_call.1} parent=0 // pred_region
    _
  $region25: #{tpu_custom_call.1} parent=0 // pred_fallthru
    _
  %v23 = vld [vmem:[%s3] sm:$0xff]
  %v24 = vld [vmem:[%s3 + $0x8] sm:$0xff]
  %v25 = vld [vmem:[%s3 + $0x10] sm:$0xff]
  %v26 = vld [vmem:[%s3 + $0x18] sm:$0xff]
  %v27 = vld [vmem:[%s4] sm:$0xff]
  %v28 = vld [vmem:[%s4 + $0x8] sm:$0xff]
  %v29 = vld [vmem:[%s4 + $0x10] sm:$0xff]
  %v30 = vld [vmem:[%s4 + $0x18] sm:$0xff]
  %v31 = vld [vmem:[%s4 + $0x20] sm:$0xff]
  %v32 = vld [vmem:[%s4 + $0x28] sm:$0xff]
  %v33 = vld [vmem:[%s4 + $0x30] sm:$0xff]
  %v34 = vld [vmem:[%s4 + $0x38] sm:$0xff]
  %v35 = vld [vmem:[%s5] sm:$0xff]
  %v36 = vld [vmem:[%s5 + $0x8] sm:$0xff]
  %v37 = vld [vmem:[%s0] sm:$0xff]
  %v38 = vld [vmem:[%s0 + $0x8] sm:$0xff]
  %v39 = vld [vmem:[%s0 + $0x10] sm:$0xff]
  %v40 = vld [vmem:[%s0 + $0x18] sm:$0xff]
  %v41 = vld [vmem:[%s1] sm:$0xff]
  %v42 = vld [vmem:[%s1 + $0x8] sm:$0xff]
  %v43 = vld [vmem:[%s1 + $0x10] sm:$0xff]
  %v44 = vld [vmem:[%s1 + $0x18] sm:$0xff]
  %v45 = vld [vmem:[%s2] sm:$0xff]
  %47 = vset.pattern.permute.xlu0 0
  %48 = vperm.xlu0 %47, %v45
  %v49 = vpop.permute.xlu0 %48
  %v51 = vlaneseq
  %v52 = vshrl.u32 %v51, 7
  %v53 = vsub.s32 0, %v52
  %v54 = vrot.slane %v35, %v53
  %v55 = vmul.f32 %v49, %v54
  %56 = vset.pattern.permute.xlu0 1
  %57 = vperm.xlu0 %56, %v45
  %v58 = vpop.permute.xlu0 %57
  %v60 = vlaneseq
  %v61 = vshrl.u32 %v60, 7
  %v62 = vsub.s32 1, %v61
  %v63 = vrot.slane %v35, %v62
  %v64 = vmul.f32 %v58, %v63
  %v65 = vadd.f32 %v55, %v64
  %66 = vset.pattern.permute.xlu0 2
  %67 = vperm.xlu0 %66, %v45
  %v68 = vpop.permute.xlu0 %67
  %v70 = vlaneseq
  %v71 = vshrl.u32 %v70, 7
  %v72 = vsub.s32 2, %v71
  %v73 = vrot.slane %v35, %v72
  %v74 = vmul.f32 %v68, %v73
  %v75 = vadd.f32 %v65, %v74
  %v76 = vlaneseq
  %v77 = vshrl.u32 %v76, 7
  %v78 = vsub.s32 3, %v77
  %v79 = vrot.slane %v35, %v78
  %v80 = vadd.f32 %v75, %v79
  %v81 = vmax.f32 %v80, 0.0
  %v82 = vlaneseq
  %v83 = vshrl.u32 %v82, 7
  %v84 = vsub.s32 4, %v83
  %v85 = vrot.slane %v35, %v84
  %90 = vrot.lane.b32.xlu0 %v27, 32
  %v91 = vpop.permute.xlu0 %90
  %92 = vrot.lane.b32.xlu0 %v28, 32
  %v93 = vpop.permute.xlu0 %92
  %94 = vrot.lane.b32.xlu0 %v29, 32
  %v95 = vpop.permute.xlu0 %94
  %96 = vrot.lane.b32.xlu0 %v30, 32
  %v97 = vpop.permute.xlu0 %96
  %vm102 = vcmask 261120
  %v104 = vsel %vm102, %v81, 0
  %106 = vmatprep.subr.mxu0 0.0
  %107 = vmatpush1.msra.mxu0 0.0
  %108 = vmatprep.subr.mxu0 0.0
  %109 = vmatpush1.msra.mxu0 0.0
  %110 = vmatprep.subr.mxu0 0.0
  %111 = vmatpush1.msra.mxu0 0.0
  %112 = vmatprep.subr.mxu0 0.0
  %113 = vmatpush1.msra.mxu0 0.0
  %114 = vmatprep.subr.mxu0 0.0
  %115 = vmatpush1.msra.mxu0 0.0
  %116 = vmatprep.subr.mxu0 0.0
  %117 = vmatpush1.msra.mxu0 0.0
  %118 = vmatprep.subr.mxu0 0.0
  %119 = vmatpush1.msra.mxu0 0.0
  %120 = vmatprep.subr.mxu0 0.0
  %121 = vmatpush1.msra.mxu0 0.0
  %122 = vmatprep.subr.mxu0 0.0
  %123 = vmatpush1.msra.mxu0 0.0
  %124 = vmatprep.subr.mxu0 0.0
  %125 = vmatpush1.msra.mxu0 0.0
  %126 = vmatprep.subr.mxu0 0.0
  %127 = vmatpush1.msra.mxu0 0.0
  %128 = vmatprep.subr.mxu0 0.0
  %129 = vmatpush1.msra.mxu0 0.0
  %130 = vmatprep.subr.mxu0 0.0
  %131 = vmatpush1.msra.mxu0 %v97
  %132 = vmatprep.subr.mxu0 0.0
  %133 = vmatpush1.msra.mxu0 %v95
  %134 = vmatprep.subr.mxu0 0.0
  %135 = vmatpush1.msra.mxu0 %v93
  %136 = vmatprep.subr.mxu0 0.0
  %137 = vmatpush1.msra.mxu0 %v91
  %138 = vmatprep.subr.mxu0 0.0
  %139 = vmatpush2.msra.mxu0 0.0
  %140 = vmatprep.subr.mxu0 0.0
  %141 = vmatpush2.msra.mxu0 0.0
  %142 = vmatprep.subr.mxu0 0.0
  %143 = vmatpush2.msra.mxu0 0.0
  %144 = vmatprep.subr.mxu0 0.0
  %145 = vmatpush2.msra.mxu0 0.0
  %146 = vmatprep.subr.mxu0 0.0
  %147 = vmatpush2.msra.mxu0 0.0
  %148 = vmatprep.subr.mxu0 0.0
  %149 = vmatpush2.msra.mxu0 0.0
  %150 = vmatprep.subr.mxu0 0.0
  %151 = vmatpush2.msra.mxu0 0.0
  %152 = vmatprep.subr.mxu0 0.0
  %153 = vmatpush2.msra.mxu0 0.0
  %154 = vmatprep.subr.mxu0 0.0
  %155 = vmatpush2.msra.mxu0 0.0
  %156 = vmatprep.subr.mxu0 0.0
  %157 = vmatpush2.msra.mxu0 0.0
  %158 = vmatprep.subr.mxu0 0.0
  %159 = vmatpush2.msra.mxu0 0.0
  %160 = vmatprep.subr.mxu0 0.0
  %161 = vmatpush2.msra.mxu0 0.0
  %162 = vmatprep.subr.mxu0 0.0
  %163 = vmatpush2.msra.mxu0 0.0
  %164 = vmatprep.subr.mxu0 0.0
  %165 = vmatpush2.msra.mxu0 0.0
  %166 = vmatprep.subr.mxu0 0.0
  %167 = vmatpush2.msra.mxu0 0.0
  %168 = vmatprep.subr.mxu0 0.0
  %169 = vmatpush2.msra.mxu0 0.0
  %170 = vmatprep.mubr.f32.mxu0 0.0
  %171 = vmatmul.mubr.f32.gmra.mxu0 %v104
  %v172 = vpop.f32.mrf.mxu0
  %v173 = vadd.f32 %v85, %v172
  %v174 = vpop.f32.mrf.mxu0
  %175 = vdwg.mxu0
  %176 = vxpose.xlu0.b32.start [1/16] %v37, 128
  %177 = vxpose.xlu0.b32.cont [2/16] %v38, 128
  %178 = vxpose.xlu0.b32.cont [3/16] %v39, 128
  %179 = vxpose.xlu0.b32.cont [4/16] %v40, 128
  %180 = vxpose.xlu0.b32.cont [5/16] 0.0, 128
  %181 = vxpose.xlu0.b32.cont [6/16] 0.0, 128
  %182 = vxpose.xlu0.b32.cont [7/16] 0.0, 128
  %183 = vxpose.xlu0.b32.cont [8/16] 0.0, 128
  %184 = vxpose.xlu0.b32.cont [9/16] 0.0, 128
  %185 = vxpose.xlu0.b32.cont [10/16] 0.0, 128
  %186 = vxpose.xlu0.b32.cont [11/16] 0.0, 128
  %187 = vxpose.xlu0.b32.cont [12/16] 0.0, 128
  %188 = vxpose.xlu0.b32.cont [13/16] 0.0, 128
  %189 = vxpose.xlu0.b32.cont [14/16] 0.0, 128
  %190 = vxpose.xlu0.b32.cont [15/16] 0.0, 128
  %191 = vxpose.xlu0.b32.end [16/16] 0.0, 128
  %v192 = vpop.trf.xlu0
  %v193 = vpop.trf.xlu0
  %v194 = vpop.trf.xlu0
  %v195 = vpop.trf.xlu0
  %v196 = vpop.trf.xlu0
  %v197 = vpop.trf.xlu0
  %v198 = vpop.trf.xlu0
  %v199 = vpop.trf.xlu0
  %v200 = vpop.trf.xlu0
  %v201 = vpop.trf.xlu0
  %v202 = vpop.trf.xlu0
  %v203 = vpop.trf.xlu0
  %v204 = vpop.trf.xlu0
  %v205 = vpop.trf.xlu0
  %v206 = vpop.trf.xlu0
  %v207 = vpop.trf.xlu0
  %v209 = vsel %vm102, %v192, 0
  %v212 = vsel %vm102, %v193, 0
  %214 = vmatprep.subr.mxu0 0.0
  %215 = vmatpush1.msra.mxu0 0.0
  %216 = vmatprep.subr.mxu0 0.0
  %217 = vmatpush1.msra.mxu0 0.0
  %218 = vmatprep.subr.mxu0 0.0
  %219 = vmatpush1.msra.mxu0 0.0
  %220 = vmatprep.subr.mxu0 0.0
  %221 = vmatpush1.msra.mxu0 0.0
  %222 = vmatprep.subr.mxu0 0.0
  %223 = vmatpush1.msra.mxu0 0.0
  %224 = vmatprep.subr.mxu0 0.0
  %225 = vmatpush1.msra.mxu0 0.0
  %226 = vmatprep.subr.mxu0 0.0
  %227 = vmatpush1.msra.mxu0 0.0
  %228 = vmatprep.subr.mxu0 0.0
  %229 = vmatpush1.msra.mxu0 0.0
  %230 = vmatprep.subr.mxu0 0.0
  %231 = vmatpush1.msra.mxu0 0.0
  %232 = vmatprep.subr.mxu0 0.0
  %233 = vmatpush1.msra.mxu0 0.0
  %234 = vmatprep.subr.mxu0 0.0
  %235 = vmatpush1.msra.mxu0 0.0
  %236 = vmatprep.subr.mxu0 0.0
  %237 = vmatpush1.msra.mxu0 0.0
  %238 = vmatprep.subr.mxu0 0.0
  %239 = vmatpush1.msra.mxu0 %v26
  %240 = vmatprep.subr.mxu0 0.0
  %241 = vmatpush1.msra.mxu0 %v25
  %242 = vmatprep.subr.mxu0 0.0
  %243 = vmatpush1.msra.mxu0 %v24
  %244 = vmatprep.subr.mxu0 0.0
  %245 = vmatpush1.msra.mxu0 %v23
  %246 = vmatprep.subr.mxu0 0.0
  %247 = vmatpush2.msra.mxu0 0.0
  %248 = vmatprep.subr.mxu0 0.0
  %249 = vmatpush2.msra.mxu0 0.0
  %250 = vmatprep.subr.mxu0 0.0
  %251 = vmatpush2.msra.mxu0 0.0
  %252 = vmatprep.subr.mxu0 0.0
  %253 = vmatpush2.msra.mxu0 0.0
  %254 = vmatprep.subr.mxu0 0.0
  %255 = vmatpush2.msra.mxu0 0.0
  %256 = vmatprep.subr.mxu0 0.0
  %257 = vmatpush2.msra.mxu0 0.0
  %258 = vmatprep.subr.mxu0 0.0
  %259 = vmatpush2.msra.mxu0 0.0
  %260 = vmatprep.subr.mxu0 0.0
  %261 = vmatpush2.msra.mxu0 0.0
  %262 = vmatprep.subr.mxu0 0.0
  %263 = vmatpush2.msra.mxu0 0.0
  %264 = vmatprep.subr.mxu0 0.0
  %265 = vmatpush2.msra.mxu0 0.0
  %266 = vmatprep.subr.mxu0 0.0
  %267 = vmatpush2.msra.mxu0 0.0
  %268 = vmatprep.subr.mxu0 0.0
  %269 = vmatpush2.msra.mxu0 0.0
  %270 = vmatprep.subr.mxu0 0.0
  %271 = vmatpush2.msra.mxu0 0.0
  %272 = vmatprep.subr.mxu0 0.0
  %273 = vmatpush2.msra.mxu0 0.0
  %274 = vmatprep.subr.mxu0 0.0
  %275 = vmatpush2.msra.mxu0 0.0
  %276 = vmatprep.subr.mxu0 0.0
  %277 = vmatpush2.msra.mxu0 0.0
  %278 = vmatprep.mubr.f32.mxu0 0.0
  %279 = vmatmul.mubr.f32.gmra.mxu0 %v209
  %v280 = vpop.f32.mrf.mxu0
  %v281 = vadd.f32 0.0, %v280
  %v282 = vpop.f32.mrf.mxu0
  %283 = vmatprep.mubr.f32.mxu0 0.0
  %284 = vmatmul.mubr.f32.gmra.mxu0 %v212
  %v285 = vpop.f32.mrf.mxu0
  %v286 = vadd.f32 0.0, %v285
  %v287 = vpop.f32.mrf.mxu0
  %288 = vdwg.mxu0
  %289 = vxpose.xlu0.b32.start [1/16] %v41, 128
  %290 = vxpose.xlu0.b32.cont [2/16] %v42, 128
  %291 = vxpose.xlu0.b32.cont [3/16] %v43, 128
  %292 = vxpose.xlu0.b32.cont [4/16] %v44, 128
  %293 = vxpose.xlu0.b32.cont [5/16] 0.0, 128
  %294 = vxpose.xlu0.b32.cont [6/16] 0.0, 128
  %295 = vxpose.xlu0.b32.cont [7/16] 0.0, 128
  %296 = vxpose.xlu0.b32.cont [8/16] 0.0, 128
  %297 = vxpose.xlu0.b32.cont [9/16] 0.0, 128
  %298 = vxpose.xlu0.b32.cont [10/16] 0.0, 128
  %299 = vxpose.xlu0.b32.cont [11/16] 0.0, 128
  %300 = vxpose.xlu0.b32.cont [12/16] 0.0, 128
  %301 = vxpose.xlu0.b32.cont [13/16] 0.0, 128
  %302 = vxpose.xlu0.b32.cont [14/16] 0.0, 128
  %303 = vxpose.xlu0.b32.cont [15/16] 0.0, 128
  %304 = vxpose.xlu0.b32.end [16/16] 0.0, 128
  %v305 = vpop.trf.xlu0
  %v306 = vpop.trf.xlu0
  %v307 = vpop.trf.xlu0
  %v308 = vpop.trf.xlu0
  %v309 = vpop.trf.xlu0
  %v310 = vpop.trf.xlu0
  %v311 = vpop.trf.xlu0
  %v312 = vpop.trf.xlu0
  %v313 = vpop.trf.xlu0
  %v314 = vpop.trf.xlu0
  %v315 = vpop.trf.xlu0
  %v316 = vpop.trf.xlu0
  %v317 = vpop.trf.xlu0
  %v318 = vpop.trf.xlu0
  %v319 = vpop.trf.xlu0
  %v320 = vpop.trf.xlu0
  %325 = vrot.lane.b32.xlu0 %v23, 96
  %v326 = vpop.permute.xlu0 %325
  %327 = vrot.lane.b32.xlu0 %v24, 96
  %v328 = vpop.permute.xlu0 %327
  %329 = vrot.lane.b32.xlu0 %v25, 96
  %v330 = vpop.permute.xlu0 %329
  %331 = vrot.lane.b32.xlu0 %v26, 96
  %v332 = vpop.permute.xlu0 %331
  %v338 = vsel %vm102, %v305, 0
  %340 = vmatprep.subr.mxu0 0.0
  %341 = vmatpush1.msra.mxu0 0.0
  %342 = vmatprep.subr.mxu0 0.0
  %343 = vmatpush1.msra.mxu0 0.0
  %344 = vmatprep.subr.mxu0 0.0
  %345 = vmatpush1.msra.mxu0 0.0
  %346 = vmatprep.subr.mxu0 0.0
  %347 = vmatpush1.msra.mxu0 0.0
  %348 = vmatprep.subr.mxu0 0.0
  %349 = vmatpush1.msra.mxu0 0.0
  %350 = vmatprep.subr.mxu0 0.0
  %351 = vmatpush1.msra.mxu0 0.0
  %352 = vmatprep.subr.mxu0 0.0
  %353 = vmatpush1.msra.mxu0 0.0
  %354 = vmatprep.subr.mxu0 0.0
  %355 = vmatpush1.msra.mxu0 0.0
  %356 = vmatprep.subr.mxu0 0.0
  %357 = vmatpush1.msra.mxu0 0.0
  %358 = vmatprep.subr.mxu0 0.0
  %359 = vmatpush1.msra.mxu0 0.0
  %360 = vmatprep.subr.mxu0 0.0
  %361 = vmatpush1.msra.mxu0 0.0
  %362 = vmatprep.subr.mxu0 0.0
  %363 = vmatpush1.msra.mxu0 0.0
  %364 = vmatprep.subr.mxu0 0.0
  %365 = vmatpush1.msra.mxu0 %v332
  %366 = vmatprep.subr.mxu0 0.0
  %367 = vmatpush1.msra.mxu0 %v330
  %368 = vmatprep.subr.mxu0 0.0
  %369 = vmatpush1.msra.mxu0 %v328
  %370 = vmatprep.subr.mxu0 0.0
  %371 = vmatpush1.msra.mxu0 %v326
  %372 = vmatprep.subr.mxu0 0.0
  %373 = vmatpush2.msra.mxu0 0.0
  %374 = vmatprep.subr.mxu0 0.0
  %375 = vmatpush2.msra.mxu0 0.0
  %376 = vmatprep.subr.mxu0 0.0
  %377 = vmatpush2.msra.mxu0 0.0
  %378 = vmatprep.subr.mxu0 0.0
  %379 = vmatpush2.msra.mxu0 0.0
  %380 = vmatprep.subr.mxu0 0.0
  %381 = vmatpush2.msra.mxu0 0.0
  %382 = vmatprep.subr.mxu0 0.0
  %383 = vmatpush2.msra.mxu0 0.0
  %384 = vmatprep.subr.mxu0 0.0
  %385 = vmatpush2.msra.mxu0 0.0
  %386 = vmatprep.subr.mxu0 0.0
  %387 = vmatpush2.msra.mxu0 0.0
  %388 = vmatprep.subr.mxu0 0.0
  %389 = vmatpush2.msra.mxu0 0.0
  %390 = vmatprep.subr.mxu0 0.0
  %391 = vmatpush2.msra.mxu0 0.0
  %392 = vmatprep.subr.mxu0 0.0
  %393 = vmatpush2.msra.mxu0 0.0
  %394 = vmatprep.subr.mxu0 0.0
  %395 = vmatpush2.msra.mxu0 0.0
  %396 = vmatprep.subr.mxu0 0.0
  %397 = vmatpush2.msra.mxu0 0.0
  %398 = vmatprep.subr.mxu0 0.0
  %399 = vmatpush2.msra.mxu0 0.0
  %400 = vmatprep.subr.mxu0 0.0
  %401 = vmatpush2.msra.mxu0 0.0
  %402 = vmatprep.subr.mxu0 0.0
  %403 = vmatpush2.msra.mxu0 0.0
  %404 = vmatprep.mubr.f32.mxu0 0.0
  %405 = vmatmul.mubr.f32.gmra.mxu0 %v338
  %v406 = vpop.f32.mrf.mxu0
  %v407 = vadd.f32 0.0, %v406
  %v408 = vpop.f32.mrf.mxu0
  %409 = vdwg.mxu0
  %410 = vrot.lane.b32.xlu0 %v23, 64
  %v411 = vpop.permute.xlu0 %410
  %412 = vrot.lane.b32.xlu0 %v24, 64
  %v413 = vpop.permute.xlu0 %412
  %414 = vrot.lane.b32.xlu0 %v25, 64
  %v415 = vpop.permute.xlu0 %414
  %416 = vrot.lane.b32.xlu0 %v26, 64
  %v417 = vpop.permute.xlu0 %416
  %v423 = vsel %vm102, %v173, 0
  %425 = vmatprep.subr.mxu0 0.0
  %426 = vmatpush1.msra.mxu0 0.0
  %427 = vmatprep.subr.mxu0 0.0
  %428 = vmatpush1.msra.mxu0 0.0
  %429 = vmatprep.subr.mxu0 0.0
  %430 = vmatpush1.msra.mxu0 0.0
  %431 = vmatprep.subr.mxu0 0.0
  %432 = vmatpush1.msra.mxu0 0.0
  %433 = vmatprep.subr.mxu0 0.0
  %434 = vmatpush1.msra.mxu0 0.0
  %435 = vmatprep.subr.mxu0 0.0
  %436 = vmatpush1.msra.mxu0 0.0
  %437 = vmatprep.subr.mxu0 0.0
  %438 = vmatpush1.msra.mxu0 0.0
  %439 = vmatprep.subr.mxu0 0.0
  %440 = vmatpush1.msra.mxu0 0.0
  %441 = vmatprep.subr.mxu0 0.0
  %442 = vmatpush1.msra.mxu0 0.0
  %443 = vmatprep.subr.mxu0 0.0
  %444 = vmatpush1.msra.mxu0 0.0
  %445 = vmatprep.subr.mxu0 0.0
  %446 = vmatpush1.msra.mxu0 0.0
  %447 = vmatprep.subr.mxu0 0.0
  %448 = vmatpush1.msra.mxu0 0.0
  %449 = vmatprep.subr.mxu0 0.0
  %450 = vmatpush1.msra.mxu0 %v417
  %451 = vmatprep.subr.mxu0 0.0
  %452 = vmatpush1.msra.mxu0 %v415
  %453 = vmatprep.subr.mxu0 0.0
  %454 = vmatpush1.msra.mxu0 %v413
  %455 = vmatprep.subr.mxu0 0.0
  %456 = vmatpush1.msra.mxu0 %v411
  %457 = vmatprep.subr.mxu0 0.0
  %458 = vmatpush2.msra.mxu0 0.0
  %459 = vmatprep.subr.mxu0 0.0
  %460 = vmatpush2.msra.mxu0 0.0
  %461 = vmatprep.subr.mxu0 0.0
  %462 = vmatpush2.msra.mxu0 0.0
  %463 = vmatprep.subr.mxu0 0.0
  %464 = vmatpush2.msra.mxu0 0.0
  %465 = vmatprep.subr.mxu0 0.0
  %466 = vmatpush2.msra.mxu0 0.0
  %467 = vmatprep.subr.mxu0 0.0
  %468 = vmatpush2.msra.mxu0 0.0
  %469 = vmatprep.subr.mxu0 0.0
  %470 = vmatpush2.msra.mxu0 0.0
  %471 = vmatprep.subr.mxu0 0.0
  %472 = vmatpush2.msra.mxu0 0.0
  %473 = vmatprep.subr.mxu0 0.0
  %474 = vmatpush2.msra.mxu0 0.0
  %475 = vmatprep.subr.mxu0 0.0
  %476 = vmatpush2.msra.mxu0 0.0
  %477 = vmatprep.subr.mxu0 0.0
  %478 = vmatpush2.msra.mxu0 0.0
  %479 = vmatprep.subr.mxu0 0.0
  %480 = vmatpush2.msra.mxu0 0.0
  %481 = vmatprep.subr.mxu0 0.0
  %482 = vmatpush2.msra.mxu0 0.0
  %483 = vmatprep.subr.mxu0 0.0
  %484 = vmatpush2.msra.mxu0 0.0
  %485 = vmatprep.subr.mxu0 0.0
  %486 = vmatpush2.msra.mxu0 0.0
  %487 = vmatprep.subr.mxu0 0.0
  %488 = vmatpush2.msra.mxu0 0.0
  %489 = vmatprep.mubr.f32.mxu0 0.0
  %490 = vmatmul.mubr.f32.gmra.mxu0 %v423
  %v491 = vpop.f32.mrf.mxu0
  %v492 = vadd.f32 0.0, %v491
  %v493 = vpop.f32.mrf.mxu0
  %494 = vdwg.mxu0
  %495 = vmatprep.subr.mxu0 0.0
  %496 = vmatpush1.msra.mxu0 0.0
  %497 = vmatprep.subr.mxu0 0.0
  %498 = vmatpush1.msra.mxu0 0.0
  %499 = vmatprep.subr.mxu0 0.0
  %500 = vmatpush1.msra.mxu0 0.0
  %501 = vmatprep.subr.mxu0 0.0
  %502 = vmatpush1.msra.mxu0 0.0
  %503 = vmatprep.subr.mxu0 0.0
  %504 = vmatpush1.msra.mxu0 0.0
  %505 = vmatprep.subr.mxu0 0.0
  %506 = vmatpush1.msra.mxu0 0.0
  %507 = vmatprep.subr.mxu0 0.0
  %508 = vmatpush1.msra.mxu0 0.0
  %509 = vmatprep.subr.mxu0 0.0
  %510 = vmatpush1.msra.mxu0 0.0
  %511 = vmatprep.subr.mxu0 0.0
  %512 = vmatpush1.msra.mxu0 0.0
  %513 = vmatprep.subr.mxu0 0.0
  %514 = vmatpush1.msra.mxu0 0.0
  %515 = vmatprep.subr.mxu0 0.0
  %516 = vmatpush1.msra.mxu0 0.0
  %517 = vmatprep.subr.mxu0 0.0
  %518 = vmatpush1.msra.mxu0 0.0
  %519 = vmatprep.subr.mxu0 0.0
  %520 = vmatpush1.msra.mxu0 %v417
  %521 = vmatprep.subr.mxu0 0.0
  %522 = vmatpush1.msra.mxu0 %v415
  %523 = vmatprep.subr.mxu0 0.0
  %524 = vmatpush1.msra.mxu0 %v413
  %525 = vmatprep.subr.mxu0 0.0
  %526 = vmatpush1.msra.mxu0 %v411
  %527 = vmatprep.subr.mxu0 0.0
  %528 = vmatpush2.msra.mxu0 0.0
  %529 = vmatprep.subr.mxu0 0.0
  %530 = vmatpush2.msra.mxu0 0.0
  %531 = vmatprep.subr.mxu0 0.0
  %532 = vmatpush2.msra.mxu0 0.0
  %533 = vmatprep.subr.mxu0 0.0
  %534 = vmatpush2.msra.mxu0 0.0
  %535 = vmatprep.subr.mxu0 0.0
  %536 = vmatpush2.msra.mxu0 0.0
  %537 = vmatprep.subr.mxu0 0.0
  %538 = vmatpush2.msra.mxu0 0.0
  %539 = vmatprep.subr.mxu0 0.0
  %540 = vmatpush2.msra.mxu0 0.0
  %541 = vmatprep.subr.mxu0 0.0
  %542 = vmatpush2.msra.mxu0 0.0
  %543 = vmatprep.subr.mxu0 0.0
  %544 = vmatpush2.msra.mxu0 0.0
  %545 = vmatprep.subr.mxu0 0.0
  %546 = vmatpush2.msra.mxu0 0.0
  %547 = vmatprep.subr.mxu0 0.0
  %548 = vmatpush2.msra.mxu0 0.0
  %549 = vmatprep.subr.mxu0 0.0
  %550 = vmatpush2.msra.mxu0 0.0
  %551 = vmatprep.subr.mxu0 0.0
  %552 = vmatpush2.msra.mxu0 0.0
  %553 = vmatprep.subr.mxu0 0.0
  %554 = vmatpush2.msra.mxu0 0.0
  %555 = vmatprep.subr.mxu0 0.0
  %556 = vmatpush2.msra.mxu0 0.0
  %557 = vmatprep.subr.mxu0 0.0
  %558 = vmatpush2.msra.mxu0 0.0
  %559 = vmatprep.mubr.f32.mxu0 0.0
  %560 = vmatmul.mubr.f32.gmra.mxu0 %v338
  %v561 = vpop.f32.mrf.mxu0
  %v562 = vadd.f32 %v492, %v561
  %v563 = vpop.f32.mrf.mxu0
  %564 = vdwg.mxu0
  %vm565 = vcmp.gt.f32.partialorder %v281, 0.0
  %vm566 = vcmp.gt.f32.partialorder %v286, 0.0
  %v567 = vadd.f32 %v281, 1.0
  %v568 = vadd.f32 %v286, 1.0
  %v569 = vmul.f32 %v281, 1.442695
  %v570 = vpow.pop %v569
  %v571 = vmul.f32 %v286, 1.442695
  %v572 = vpow.pop %v571
  %v573 = vsel %vm565, %v567, %v570
  %v574 = vsel %vm566, %v568, %v572
  %vm575 = vcmp.gt.f32.partialorder %v407, 0.0
  %v576 = vadd.f32 %v407, 1.0
  %v577 = vmul.f32 %v407, 1.442695
  %v578 = vpow.pop %v577
  %v579 = vsel %vm575, %v576, %v578
  %v580 = vmul.f32 %v562, 0.125
  %581 = vxpose.xlu0.b32.start [1/16] %v579, 128
  %582 = vxpose.xlu0.b32.cont [2/16] 0.0, 128
  %583 = vxpose.xlu0.b32.cont [3/16] 0.0, 128
  %584 = vxpose.xlu0.b32.cont [4/16] 0.0, 128
  %585 = vxpose.xlu0.b32.cont [5/16] 0.0, 128
  %586 = vxpose.xlu0.b32.cont [6/16] 0.0, 128
  %587 = vxpose.xlu0.b32.cont [7/16] 0.0, 128
  %588 = vxpose.xlu0.b32.cont [8/16] 0.0, 128
  %589 = vxpose.xlu0.b32.cont [9/16] 0.0, 128
  %590 = vxpose.xlu0.b32.cont [10/16] 0.0, 128
  %591 = vxpose.xlu0.b32.cont [11/16] 0.0, 128
  %592 = vxpose.xlu0.b32.cont [12/16] 0.0, 128
  %593 = vxpose.xlu0.b32.cont [13/16] 0.0, 128
  %594 = vxpose.xlu0.b32.cont [14/16] 0.0, 128
  %595 = vxpose.xlu0.b32.cont [15/16] 0.0, 128
  %596 = vxpose.xlu0.b32.end [16/16] 0.0, 128
  %v597 = vpop.trf.xlu0
  %v598 = vpop.trf.xlu0
  %v599 = vpop.trf.xlu0
  %v600 = vpop.trf.xlu0
  %v601 = vpop.trf.xlu0
  %v602 = vpop.trf.xlu0
  %v603 = vpop.trf.xlu0
  %v604 = vpop.trf.xlu0
  %v605 = vpop.trf.xlu0
  %v606 = vpop.trf.xlu0
  %v607 = vpop.trf.xlu0
  %v608 = vpop.trf.xlu0
  %v609 = vpop.trf.xlu0
  %v610 = vpop.trf.xlu0
  %v611 = vpop.trf.xlu0
  %v612 = vpop.trf.xlu0
  %vm613 = vcmask 64512
  %v615 = vsel %vm613, %v597, 0
  %v618 = vsel %vm613, %v598, 0
  %v621 = vsel %vm613, %v599, 0
  %v624 = vsel %vm613, %v600, 0
  %626 = vmatprep.subr.mxu0 0.0
  %627 = vmatpush1.msra.mxu0 0.0
  %628 = vmatprep.subr.mxu0 0.0
  %629 = vmatpush1.msra.mxu0 0.0
  %630 = vmatprep.subr.mxu0 0.0
  %631 = vmatpush1.msra.mxu0 0.0
  %632 = vmatprep.subr.mxu0 0.0
  %633 = vmatpush1.msra.mxu0 0.0
  %634 = vmatprep.subr.mxu0 0.0
  %635 = vmatpush1.msra.mxu0 0.0
  %636 = vmatprep.subr.mxu0 0.0
  %637 = vmatpush1.msra.mxu0 0.0
  %638 = vmatprep.subr.mxu0 0.0
  %639 = vmatpush1.msra.mxu0 0.0
  %640 = vmatprep.subr.mxu0 0.0
  %641 = vmatpush1.msra.mxu0 0.0
  %642 = vmatprep.subr.mxu0 0.0
  %643 = vmatpush1.msra.mxu0 0.0
  %644 = vmatprep.subr.mxu0 0.0
  %645 = vmatpush1.msra.mxu0 0.0
  %646 = vmatprep.subr.mxu0 0.0
  %647 = vmatpush1.msra.mxu0 0.0
  %648 = vmatprep.subr.mxu0 0.0
  %649 = vmatpush1.msra.mxu0 0.0
  %650 = vmatprep.subr.mxu0 0.0
  %651 = vmatpush1.msra.mxu0 0.0
  %652 = vmatprep.subr.mxu0 0.0
  %653 = vmatpush1.msra.mxu0 0.0
  %654 = vmatprep.subr.mxu0 0.0
  %655 = vmatpush1.msra.mxu0 0.0
  %656 = vmatprep.subr.mxu0 0.0
  %657 = vmatpush1.msra.mxu0 %v580
  %658 = vmatprep.subr.mxu0 0.0
  %659 = vmatpush2.msra.mxu0 0.0
  %660 = vmatprep.subr.mxu0 0.0
  %661 = vmatpush2.msra.mxu0 0.0
  %662 = vmatprep.subr.mxu0 0.0
  %663 = vmatpush2.msra.mxu0 0.0
  %664 = vmatprep.subr.mxu0 0.0
  %665 = vmatpush2.msra.mxu0 0.0
  %666 = vmatprep.subr.mxu0 0.0
  %667 = vmatpush2.msra.mxu0 0.0
  %668 = vmatprep.subr.mxu0 0.0
  %669 = vmatpush2.msra.mxu0 0.0
  %670 = vmatprep.subr.mxu0 0.0
  %671 = vmatpush2.msra.mxu0 0.0
  %672 = vmatprep.subr.mxu0 0.0
  %673 = vmatpush2.msra.mxu0 0.0
  %674 = vmatprep.subr.mxu0 0.0
  %675 = vmatpush2.msra.mxu0 0.0
  %676 = vmatprep.subr.mxu0 0.0
  %677 = vmatpush2.msra.mxu0 0.0
  %678 = vmatprep.subr.mxu0 0.0
  %679 = vmatpush2.msra.mxu0 0.0
  %680 = vmatprep.subr.mxu0 0.0
  %681 = vmatpush2.msra.mxu0 0.0
  %682 = vmatprep.subr.mxu0 0.0
  %683 = vmatpush2.msra.mxu0 0.0
  %684 = vmatprep.subr.mxu0 0.0
  %685 = vmatpush2.msra.mxu0 0.0
  %686 = vmatprep.subr.mxu0 0.0
  %687 = vmatpush2.msra.mxu0 0.0
  %688 = vmatprep.subr.mxu0 0.0
  %689 = vmatpush2.msra.mxu0 0.0
  %690 = vmatprep.mubr.f32.mxu0 0.0
  %691 = vmatmul.mubr.f32.gmra.mxu0 %v615
  %v692 = vpop.f32.mrf.mxu0
  %v693 = vadd.f32 0.0, %v692
  %v694 = vpop.f32.mrf.mxu0
  %695 = vmatprep.mubr.f32.mxu0 0.0
  %696 = vmatmul.mubr.f32.gmra.mxu0 %v618
  %v697 = vpop.f32.mrf.mxu0
  %v698 = vadd.f32 0.0, %v697
  %v699 = vpop.f32.mrf.mxu0
  %700 = vmatprep.mubr.f32.mxu0 0.0
  %701 = vmatmul.mubr.f32.gmra.mxu0 %v621
  %v702 = vpop.f32.mrf.mxu0
  %v703 = vadd.f32 0.0, %v702
  %v704 = vpop.f32.mrf.mxu0
  %705 = vmatprep.mubr.f32.mxu0 0.0
  %706 = vmatmul.mubr.f32.gmra.mxu0 %v624
  %v707 = vpop.f32.mrf.mxu0
  %v708 = vadd.f32 0.0, %v707
  %v709 = vpop.f32.mrf.mxu0
  %710 = vdwg.mxu0
  %715 = vrot.lane.b32.xlu0 %v31, 32
  %v716 = vpop.permute.xlu0 %715
  %717 = vrot.lane.b32.xlu0 %v32, 32
  %v718 = vpop.permute.xlu0 %717
  %719 = vrot.lane.b32.xlu0 %v33, 32
  %v720 = vpop.permute.xlu0 %719
  %721 = vrot.lane.b32.xlu0 %v34, 32
  %v722 = vpop.permute.xlu0 %721
  %v727 = vmul.f32 %v693, %v716
  %v728 = vmul.f32 %v698, %v718
  %v729 = vmul.f32 %v703, %v720
  %v730 = vmul.f32 %v708, %v722
  %v731 = vsel %vm102, %v579, 0.0
  %v732 = vrot.slane %v731, 4
  %v733 = vadd.f32 %v731, %v732
  %v734 = vrot.slane %v733, 2
  %v735 = vadd.f32 %v733, %v734
  %v736 = vrot.slane %v735, 1
  %v737 = vadd.f32 %v735, %v736
  %v739 = vsel %vm102, %v573, 0
  %v742 = vsel %vm102, %v574, 0
  %744 = vmatprep.subr.mxu0 0.0
  %745 = vmatpush1.msra.mxu0 0.0
  %746 = vmatprep.subr.mxu0 0.0
  %747 = vmatpush1.msra.mxu0 0.0
  %748 = vmatprep.subr.mxu0 0.0
  %749 = vmatpush1.msra.mxu0 0.0
  %750 = vmatprep.subr.mxu0 0.0
  %751 = vmatpush1.msra.mxu0 0.0
  %752 = vmatprep.subr.mxu0 0.0
  %753 = vmatpush1.msra.mxu0 0.0
  %754 = vmatprep.subr.mxu0 0.0
  %755 = vmatpush1.msra.mxu0 0.0
  %756 = vmatprep.subr.mxu0 0.0
  %757 = vmatpush1.msra.mxu0 0.0
  %758 = vmatprep.subr.mxu0 0.0
  %759 = vmatpush1.msra.mxu0 0.0
  %760 = vmatprep.subr.mxu0 0.0
  %761 = vmatpush1.msra.mxu0 0.0
  %762 = vmatprep.subr.mxu0 0.0
  %763 = vmatpush1.msra.mxu0 0.0
  %764 = vmatprep.subr.mxu0 0.0
  %765 = vmatpush1.msra.mxu0 0.0
  %766 = vmatprep.subr.mxu0 0.0
  %767 = vmatpush1.msra.mxu0 0.0
  %768 = vmatprep.subr.mxu0 0.0
  %769 = vmatpush1.msra.mxu0 %v730
  %770 = vmatprep.subr.mxu0 0.0
  %771 = vmatpush1.msra.mxu0 %v729
  %772 = vmatprep.subr.mxu0 0.0
  %773 = vmatpush1.msra.mxu0 %v728
  %774 = vmatprep.subr.mxu0 0.0
  %775 = vmatpush1.msra.mxu0 %v727
  %776 = vmatprep.subr.mxu0 0.0
  %777 = vmatpush2.msra.mxu0 0.0
  %778 = vmatprep.subr.mxu0 0.0
  %779 = vmatpush2.msra.mxu0 0.0
  %780 = vmatprep.subr.mxu0 0.0
  %781 = vmatpush2.msra.mxu0 0.0
  %782 = vmatprep.subr.mxu0 0.0
  %783 = vmatpush2.msra.mxu0 0.0
  %784 = vmatprep.subr.mxu0 0.0
  %785 = vmatpush2.msra.mxu0 0.0
  %786 = vmatprep.subr.mxu0 0.0
  %787 = vmatpush2.msra.mxu0 0.0
  %788 = vmatprep.subr.mxu0 0.0
  %789 = vmatpush2.msra.mxu0 0.0
  %790 = vmatprep.subr.mxu0 0.0
  %791 = vmatpush2.msra.mxu0 0.0
  %792 = vmatprep.subr.mxu0 0.0
  %793 = vmatpush2.msra.mxu0 0.0
  %794 = vmatprep.subr.mxu0 0.0
  %795 = vmatpush2.msra.mxu0 0.0
  %796 = vmatprep.subr.mxu0 0.0
  %797 = vmatpush2.msra.mxu0 0.0
  %798 = vmatprep.subr.mxu0 0.0
  %799 = vmatpush2.msra.mxu0 0.0
  %800 = vmatprep.subr.mxu0 0.0
  %801 = vmatpush2.msra.mxu0 0.0
  %802 = vmatprep.subr.mxu0 0.0
  %803 = vmatpush2.msra.mxu0 0.0
  %804 = vmatprep.subr.mxu0 0.0
  %805 = vmatpush2.msra.mxu0 0.0
  %806 = vmatprep.subr.mxu0 0.0
  %807 = vmatpush2.msra.mxu0 0.0
  %808 = vmatprep.mubr.f32.mxu0 0.0
  %809 = vmatmul.mubr.f32.gmra.mxu0 %v739
  %v810 = vpop.f32.mrf.mxu0
  %v811 = vadd.f32 0.0, %v810
  %v812 = vpop.f32.mrf.mxu0
  %813 = vmatprep.mubr.f32.mxu0 0.0
  %814 = vmatmul.mubr.f32.gmra.mxu0 %v742
  %v815 = vpop.f32.mrf.mxu0
  %v816 = vadd.f32 0.0, %v815
  %v817 = vpop.f32.mrf.mxu0
  %818 = vdwg.mxu0
  %v819 = vmul.f32 %v573, %v737
  %v820 = vmul.f32 %v574, %v737
  %v822 = vsel %vm102, %v819, 0
  %v825 = vsel %vm102, %v820, 0
  %827 = vmatprep.subr.mxu0 0.0
  %828 = vmatpush1.msra.mxu0 0.0
  %829 = vmatprep.subr.mxu0 0.0
  %830 = vmatpush1.msra.mxu0 0.0
  %831 = vmatprep.subr.mxu0 0.0
  %832 = vmatpush1.msra.mxu0 0.0
  %833 = vmatprep.subr.mxu0 0.0
  %834 = vmatpush1.msra.mxu0 0.0
  %835 = vmatprep.subr.mxu0 0.0
  %836 = vmatpush1.msra.mxu0 0.0
  %837 = vmatprep.subr.mxu0 0.0
  %838 = vmatpush1.msra.mxu0 0.0
  %839 = vmatprep.subr.mxu0 0.0
  %840 = vmatpush1.msra.mxu0 0.0
  %841 = vmatprep.subr.mxu0 0.0
  %842 = vmatpush1.msra.mxu0 0.0
  %843 = vmatprep.subr.mxu0 0.0
  %844 = vmatpush1.msra.mxu0 0.0
  %845 = vmatprep.subr.mxu0 0.0
  %846 = vmatpush1.msra.mxu0 0.0
  %847 = vmatprep.subr.mxu0 0.0
  %848 = vmatpush1.msra.mxu0 0.0
  %849 = vmatprep.subr.mxu0 0.0
  %850 = vmatpush1.msra.mxu0 0.0
  %851 = vmatprep.subr.mxu0 0.0
  %852 = vmatpush1.msra.mxu0 %v722
  %853 = vmatprep.subr.mxu0 0.0
  %854 = vmatpush1.msra.mxu0 %v720
  %855 = vmatprep.subr.mxu0 0.0
  %856 = vmatpush1.msra.mxu0 %v718
  %857 = vmatprep.subr.mxu0 0.0
  %858 = vmatpush1.msra.mxu0 %v716
  %859 = vmatprep.subr.mxu0 0.0
  %860 = vmatpush2.msra.mxu0 0.0
  %861 = vmatprep.subr.mxu0 0.0
  %862 = vmatpush2.msra.mxu0 0.0
  %863 = vmatprep.subr.mxu0 0.0
  %864 = vmatpush2.msra.mxu0 0.0
  %865 = vmatprep.subr.mxu0 0.0
  %866 = vmatpush2.msra.mxu0 0.0
  %867 = vmatprep.subr.mxu0 0.0
  %868 = vmatpush2.msra.mxu0 0.0
  %869 = vmatprep.subr.mxu0 0.0
  %870 = vmatpush2.msra.mxu0 0.0
  %871 = vmatprep.subr.mxu0 0.0
  %872 = vmatpush2.msra.mxu0 0.0
  %873 = vmatprep.subr.mxu0 0.0
  %874 = vmatpush2.msra.mxu0 0.0
  %875 = vmatprep.subr.mxu0 0.0
  %876 = vmatpush2.msra.mxu0 0.0
  %877 = vmatprep.subr.mxu0 0.0
  %878 = vmatpush2.msra.mxu0 0.0
  %879 = vmatprep.subr.mxu0 0.0
  %880 = vmatpush2.msra.mxu0 0.0
  %881 = vmatprep.subr.mxu0 0.0
  %882 = vmatpush2.msra.mxu0 0.0
  %883 = vmatprep.subr.mxu0 0.0
  %884 = vmatpush2.msra.mxu0 0.0
  %885 = vmatprep.subr.mxu0 0.0
  %886 = vmatpush2.msra.mxu0 0.0
  %887 = vmatprep.subr.mxu0 0.0
  %888 = vmatpush2.msra.mxu0 0.0
  %889 = vmatprep.subr.mxu0 0.0
  %890 = vmatpush2.msra.mxu0 0.0
  %891 = vmatprep.mubr.f32.mxu0 0.0
  %892 = vmatmul.mubr.f32.gmra.mxu0 %v822
  %v893 = vpop.f32.mrf.mxu0
  %v894 = vadd.f32 1e-06, %v893
  %v895 = vpop.f32.mrf.mxu0
  %896 = vmatprep.mubr.f32.mxu0 0.0
  %897 = vmatmul.mubr.f32.gmra.mxu0 %v825
  %v898 = vpop.f32.mrf.mxu0
  %v899 = vadd.f32 1e-06, %v898
  %v900 = vpop.f32.mrf.mxu0
  %901 = vdwg.mxu0
  %v902 = vrcp.pop %v894
  %v903 = vmul.f32 8.0, %v902
  %v904 = vrcp.pop %v899
  %v905 = vmul.f32 8.0, %v904
  %v906 = vmul.f32 %v811, %v903
  %v907 = vmul.f32 %v816, %v905
  %908 = vmatprep.subr.mxu0 0.0
  %909 = vmatpush1.msra.mxu0 0.0
  %910 = vmatprep.subr.mxu0 0.0
  %911 = vmatpush1.msra.mxu0 0.0
  %912 = vmatprep.subr.mxu0 0.0
  %913 = vmatpush1.msra.mxu0 0.0
  %914 = vmatprep.subr.mxu0 0.0
  %915 = vmatpush1.msra.mxu0 0.0
  %916 = vmatprep.subr.mxu0 0.0
  %917 = vmatpush1.msra.mxu0 0.0
  %918 = vmatprep.subr.mxu0 0.0
  %919 = vmatpush1.msra.mxu0 0.0
  %920 = vmatprep.subr.mxu0 0.0
  %921 = vmatpush1.msra.mxu0 0.0
  %922 = vmatprep.subr.mxu0 0.0
  %923 = vmatpush1.msra.mxu0 0.0
  %924 = vmatprep.subr.mxu0 0.0
  %925 = vmatpush1.msra.mxu0 0.0
  %926 = vmatprep.subr.mxu0 0.0
  %927 = vmatpush1.msra.mxu0 0.0
  %928 = vmatprep.subr.mxu0 0.0
  %929 = vmatpush1.msra.mxu0 0.0
  %930 = vmatprep.subr.mxu0 0.0
  %931 = vmatpush1.msra.mxu0 0.0
  %932 = vmatprep.subr.mxu0 0.0
  %933 = vmatpush1.msra.mxu0 %v30
  %934 = vmatprep.subr.mxu0 0.0
  %935 = vmatpush1.msra.mxu0 %v29
  %936 = vmatprep.subr.mxu0 0.0
  %937 = vmatpush1.msra.mxu0 %v28
  %938 = vmatprep.subr.mxu0 0.0
  %939 = vmatpush1.msra.mxu0 %v27
  %940 = vmatprep.subr.mxu0 0.0
  %941 = vmatpush2.msra.mxu0 0.0
  %942 = vmatprep.subr.mxu0 0.0
  %943 = vmatpush2.msra.mxu0 0.0
  %944 = vmatprep.subr.mxu0 0.0
  %945 = vmatpush2.msra.mxu0 0.0
  %946 = vmatprep.subr.mxu0 0.0
  %947 = vmatpush2.msra.mxu0 0.0
  %948 = vmatprep.subr.mxu0 0.0
  %949 = vmatpush2.msra.mxu0 0.0
  %950 = vmatprep.subr.mxu0 0.0
  %951 = vmatpush2.msra.mxu0 0.0
  %952 = vmatprep.subr.mxu0 0.0
  %953 = vmatpush2.msra.mxu0 0.0
  %954 = vmatprep.subr.mxu0 0.0
  %955 = vmatpush2.msra.mxu0 0.0
  %956 = vmatprep.subr.mxu0 0.0
  %957 = vmatpush2.msra.mxu0 0.0
  %958 = vmatprep.subr.mxu0 0.0
  %959 = vmatpush2.msra.mxu0 0.0
  %960 = vmatprep.subr.mxu0 0.0
  %961 = vmatpush2.msra.mxu0 0.0
  %962 = vmatprep.subr.mxu0 0.0
  %963 = vmatpush2.msra.mxu0 0.0
  %964 = vmatprep.subr.mxu0 0.0
  %965 = vmatpush2.msra.mxu0 0.0
  %966 = vmatprep.subr.mxu0 0.0
  %967 = vmatpush2.msra.mxu0 0.0
  %968 = vmatprep.subr.mxu0 0.0
  %969 = vmatpush2.msra.mxu0 0.0
  %970 = vmatprep.subr.mxu0 0.0
  %971 = vmatpush2.msra.mxu0 0.0
  %972 = vmatprep.mubr.f32.mxu0 0.0
  %973 = vmatmul.mubr.f32.gmra.mxu0 %v209
  %v974 = vpop.f32.mrf.mxu0
  %v975 = vadd.f32 0.0, %v974
  %v976 = vpop.f32.mrf.mxu0
  %977 = vmatprep.mubr.f32.mxu0 0.0
  %978 = vmatmul.mubr.f32.gmra.mxu0 %v212
  %v979 = vpop.f32.mrf.mxu0
  %v980 = vadd.f32 0.0, %v979
  %v981 = vpop.f32.mrf.mxu0
  %982 = vdwg.mxu0
  %s983 = scalar_lea.vmem %s0, 32
  %v984 = vld [vmem:[%s983] sm:$0xff]
  %v985 = vld [vmem:[%s983 + $0x8] sm:$0xff]
  %v986 = vld [vmem:[%s983 + $0x10] sm:$0xff]
  %v987 = vld [vmem:[%s983 + $0x18] sm:$0xff]
  %s988 = scalar_lea.vmem %s1, 32
  %v989 = vld [vmem:[%s988] sm:$0xff]
  %v990 = vld [vmem:[%s988 + $0x8] sm:$0xff]
  %v991 = vld [vmem:[%s988 + $0x10] sm:$0xff]
  %v992 = vld [vmem:[%s988 + $0x18] sm:$0xff]
  %s993 = scalar_lea.vmem %s2, 8
  %v994 = vld [vmem:[%s993] sm:$0xff]
  %996 = vset.pattern.permute.xlu0 0
  %997 = vperm.xlu0 %996, %v994
  %v998 = vpop.permute.xlu0 %997
  %v1000 = vmul.f32 %v998, %v54
  %1001 = vset.pattern.permute.xlu0 1
  %1002 = vperm.xlu0 %1001, %v994
  %v1003 = vpop.permute.xlu0 %1002
  %v1005 = vmul.f32 %v1003, %v63
  %v1006 = vadd.f32 %v1000, %v1005
  %1007 = vset.pattern.permute.xlu0 2
  %1008 = vperm.xlu0 %1007, %v994
  %v1009 = vpop.permute.xlu0 %1008
  %v1011 = vmul.f32 %v1009, %v73
  %v1012 = vadd.f32 %v1006, %v1011
  %v1013 = vadd.f32 %v1012, %v79
  %v1014 = vmax.f32 %v1013, 0.0
  %v1016 = vsel %vm102, %v1014, 0
  %1018 = vmatprep.subr.mxu0 0.0
  %1019 = vmatpush1.msra.mxu0 0.0
  %1020 = vmatprep.subr.mxu0 0.0
  %1021 = vmatpush1.msra.mxu0 0.0
  %1022 = vmatprep.subr.mxu0 0.0
  %1023 = vmatpush1.msra.mxu0 0.0
  %1024 = vmatprep.subr.mxu0 0.0
  %1025 = vmatpush1.msra.mxu0 0.0
  %1026 = vmatprep.subr.mxu0 0.0
  %1027 = vmatpush1.msra.mxu0 0.0
  %1028 = vmatprep.subr.mxu0 0.0
  %1029 = vmatpush1.msra.mxu0 0.0
  %1030 = vmatprep.subr.mxu0 0.0
  %1031 = vmatpush1.msra.mxu0 0.0
  %1032 = vmatprep.subr.mxu0 0.0
  %1033 = vmatpush1.msra.mxu0 0.0
  %1034 = vmatprep.subr.mxu0 0.0
  %1035 = vmatpush1.msra.mxu0 0.0
  %1036 = vmatprep.subr.mxu0 0.0
  %1037 = vmatpush1.msra.mxu0 0.0
  %1038 = vmatprep.subr.mxu0 0.0
  %1039 = vmatpush1.msra.mxu0 0.0
  %1040 = vmatprep.subr.mxu0 0.0
  %1041 = vmatpush1.msra.mxu0 0.0
  %1042 = vmatprep.subr.mxu0 0.0
  %1043 = vmatpush1.msra.mxu0 %v97
  %1044 = vmatprep.subr.mxu0 0.0
  %1045 = vmatpush1.msra.mxu0 %v95
  %1046 = vmatprep.subr.mxu0 0.0
  %1047 = vmatpush1.msra.mxu0 %v93
  %1048 = vmatprep.subr.mxu0 0.0
  %1049 = vmatpush1.msra.mxu0 %v91
  %1050 = vmatprep.subr.mxu0 0.0
  %1051 = vmatpush2.msra.mxu0 0.0
  %1052 = vmatprep.subr.mxu0 0.0
  %1053 = vmatpush2.msra.mxu0 0.0
  %1054 = vmatprep.subr.mxu0 0.0
  %1055 = vmatpush2.msra.mxu0 0.0
  %1056 = vmatprep.subr.mxu0 0.0
  %1057 = vmatpush2.msra.mxu0 0.0
  %1058 = vmatprep.subr.mxu0 0.0
  %1059 = vmatpush2.msra.mxu0 0.0
  %1060 = vmatprep.subr.mxu0 0.0
  %1061 = vmatpush2.msra.mxu0 0.0
  %1062 = vmatprep.subr.mxu0 0.0
  %1063 = vmatpush2.msra.mxu0 0.0
  %1064 = vmatprep.subr.mxu0 0.0
  %1065 = vmatpush2.msra.mxu0 0.0
  %1066 = vmatprep.subr.mxu0 0.0
  %1067 = vmatpush2.msra.mxu0 0.0
  %1068 = vmatprep.subr.mxu0 0.0
  %1069 = vmatpush2.msra.mxu0 0.0
  %1070 = vmatprep.subr.mxu0 0.0
  %1071 = vmatpush2.msra.mxu0 0.0
  %1072 = vmatprep.subr.mxu0 0.0
  %1073 = vmatpush2.msra.mxu0 0.0
  %1074 = vmatprep.subr.mxu0 0.0
  %1075 = vmatpush2.msra.mxu0 0.0
  %1076 = vmatprep.subr.mxu0 0.0
  %1077 = vmatpush2.msra.mxu0 0.0
  %1078 = vmatprep.subr.mxu0 0.0
  %1079 = vmatpush2.msra.mxu0 0.0
  %1080 = vmatprep.subr.mxu0 0.0
  %1081 = vmatpush2.msra.mxu0 0.0
  %1082 = vmatprep.mubr.f32.mxu0 0.0
  %1083 = vmatmul.mubr.f32.gmra.mxu0 %v1016
  %v1084 = vpop.f32.mrf.mxu0
  %v1085 = vadd.f32 %v85, %v1084
  %v1086 = vpop.f32.mrf.mxu0
  %1087 = vdwg.mxu0
  %1088 = vxpose.xlu0.b32.start [1/16] %v984, 128
  %1089 = vxpose.xlu0.b32.cont [2/16] %v985, 128
  %1090 = vxpose.xlu0.b32.cont [3/16] %v986, 128
  %1091 = vxpose.xlu0.b32.cont [4/16] %v987, 128
  %1092 = vxpose.xlu0.b32.cont [5/16] 0.0, 128
  %1093 = vxpose.xlu0.b32.cont [6/16] 0.0, 128
  %1094 = vxpose.xlu0.b32.cont [7/16] 0.0, 128
  %1095 = vxpose.xlu0.b32.cont [8/16] 0.0, 128
  %1096 = vxpose.xlu0.b32.cont [9/16] 0.0, 128
  %1097 = vxpose.xlu0.b32.cont [10/16] 0.0, 128
  %1098 = vxpose.xlu0.b32.cont [11/16] 0.0, 128
  %1099 = vxpose.xlu0.b32.cont [12/16] 0.0, 128
  %1100 = vxpose.xlu0.b32.cont [13/16] 0.0, 128
  %1101 = vxpose.xlu0.b32.cont [14/16] 0.0, 128
  %1102 = vxpose.xlu0.b32.cont [15/16] 0.0, 128
  %1103 = vxpose.xlu0.b32.end [16/16] 0.0, 128
  %v1104 = vpop.trf.xlu0
  %v1105 = vpop.trf.xlu0
  %v1106 = vpop.trf.xlu0
  %v1107 = vpop.trf.xlu0
  %v1108 = vpop.trf.xlu0
  %v1109 = vpop.trf.xlu0
  %v1110 = vpop.trf.xlu0
  %v1111 = vpop.trf.xlu0
  %v1112 = vpop.trf.xlu0
  %v1113 = vpop.trf.xlu0
  %v1114 = vpop.trf.xlu0
  %v1115 = vpop.trf.xlu0
  %v1116 = vpop.trf.xlu0
  %v1117 = vpop.trf.xlu0
  %v1118 = vpop.trf.xlu0
  %v1119 = vpop.trf.xlu0
  %v1121 = vsel %vm102, %v1104, 0
  %v1124 = vsel %vm102, %v1105, 0
  %1126 = vmatprep.subr.mxu0 0.0
  %1127 = vmatpush1.msra.mxu0 0.0
  %1128 = vmatprep.subr.mxu0 0.0
  %1129 = vmatpush1.msra.mxu0 0.0
  %1130 = vmatprep.subr.mxu0 0.0
  %1131 = vmatpush1.msra.mxu0 0.0
  %1132 = vmatprep.subr.mxu0 0.0
  %1133 = vmatpush1.msra.mxu0 0.0
  %1134 = vmatprep.subr.mxu0 0.0
  %1135 = vmatpush1.msra.mxu0 0.0
  %1136 = vmatprep.subr.mxu0 0.0
  %1137 = vmatpush1.msra.mxu0 0.0
  %1138 = vmatprep.subr.mxu0 0.0
  %1139 = vmatpush1.msra.mxu0 0.0
  %1140 = vmatprep.subr.mxu0 0.0
  %1141 = vmatpush1.msra.mxu0 0.0
  %1142 = vmatprep.subr.mxu0 0.0
  %1143 = vmatpush1.msra.mxu0 0.0
  %1144 = vmatprep.subr.mxu0 0.0
  %1145 = vmatpush1.msra.mxu0 0.0
  %1146 = vmatprep.subr.mxu0 0.0
  %1147 = vmatpush1.msra.mxu0 0.0
  %1148 = vmatprep.subr.mxu0 0.0
  %1149 = vmatpush1.msra.mxu0 0.0
  %1150 = vmatprep.subr.mxu0 0.0
  %1151 = vmatpush1.msra.mxu0 %v26
  %1152 = vmatprep.subr.mxu0 0.0
  %1153 = vmatpush1.msra.mxu0 %v25
  %1154 = vmatprep.subr.mxu0 0.0
  %1155 = vmatpush1.msra.mxu0 %v24
  %1156 = vmatprep.subr.mxu0 0.0
  %1157 = vmatpush1.msra.mxu0 %v23
  %1158 = vmatprep.subr.mxu0 0.0
  %1159 = vmatpush2.msra.mxu0 0.0
  %1160 = vmatprep.subr.mxu0 0.0
  %1161 = vmatpush2.msra.mxu0 0.0
  %1162 = vmatprep.subr.mxu0 0.0
  %1163 = vmatpush2.msra.mxu0 0.0
  %1164 = vmatprep.subr.mxu0 0.0
  %1165 = vmatpush2.msra.mxu0 0.0
  %1166 = vmatprep.subr.mxu0 0.0
  %1167 = vmatpush2.msra.mxu0 0.0
  %1168 = vmatprep.subr.mxu0 0.0
  %1169 = vmatpush2.msra.mxu0 0.0
  %1170 = vmatprep.subr.mxu0 0.0
  %1171 = vmatpush2.msra.mxu0 0.0
  %1172 = vmatprep.subr.mxu0 0.0
  %1173 = vmatpush2.msra.mxu0 0.0
  %1174 = vmatprep.subr.mxu0 0.0
  %1175 = vmatpush2.msra.mxu0 0.0
  %1176 = vmatprep.subr.mxu0 0.0
  %1177 = vmatpush2.msra.mxu0 0.0
  %1178 = vmatprep.subr.mxu0 0.0
  %1179 = vmatpush2.msra.mxu0 0.0
  %1180 = vmatprep.subr.mxu0 0.0
  %1181 = vmatpush2.msra.mxu0 0.0
  %1182 = vmatprep.subr.mxu0 0.0
  %1183 = vmatpush2.msra.mxu0 0.0
  %1184 = vmatprep.subr.mxu0 0.0
  %1185 = vmatpush2.msra.mxu0 0.0
  %1186 = vmatprep.subr.mxu0 0.0
  %1187 = vmatpush2.msra.mxu0 0.0
  %1188 = vmatprep.subr.mxu0 0.0
  %1189 = vmatpush2.msra.mxu0 0.0
  %1190 = vmatprep.mubr.f32.mxu0 0.0
  %1191 = vmatmul.mubr.f32.gmra.mxu0 %v1121
  %v1192 = vpop.f32.mrf.mxu0
  %v1193 = vadd.f32 0.0, %v1192
  %v1194 = vpop.f32.mrf.mxu0
  %1195 = vmatprep.mubr.f32.mxu0 0.0
  %1196 = vmatmul.mubr.f32.gmra.mxu0 %v1124
  %v1197 = vpop.f32.mrf.mxu0
  %v1198 = vadd.f32 0.0, %v1197
  %v1199 = vpop.f32.mrf.mxu0
  %1200 = vdwg.mxu0
  %1201 = vxpose.xlu0.b32.start [1/16] %v989, 128
  %1202 = vxpose.xlu0.b32.cont [2/16] %v990, 128
  %1203 = vxpose.xlu0.b32.cont [3/16] %v991, 128
  %1204 = vxpose.xlu0.b32.cont [4/16] %v992, 128
  %1205 = vxpose.xlu0.b32.cont [5/16] 0.0, 128
  %1206 = vxpose.xlu0.b32.cont [6/16] 0.0, 128
  %1207 = vxpose.xlu0.b32.cont [7/16] 0.0, 128
  %1208 = vxpose.xlu0.b32.cont [8/16] 0.0, 128
  %1209 = vxpose.xlu0.b32.cont [9/16] 0.0, 128
  %1210 = vxpose.xlu0.b32.cont [10/16] 0.0, 128
  %1211 = vxpose.xlu0.b32.cont [11/16] 0.0, 128
  %1212 = vxpose.xlu0.b32.cont [12/16] 0.0, 128
  %1213 = vxpose.xlu0.b32.cont [13/16] 0.0, 128
  %1214 = vxpose.xlu0.b32.cont [14/16] 0.0, 128
  %1215 = vxpose.xlu0.b32.cont [15/16] 0.0, 128
  %1216 = vxpose.xlu0.b32.end [16/16] 0.0, 128
  %v1217 = vpop.trf.xlu0
  %v1218 = vpop.trf.xlu0
  %v1219 = vpop.trf.xlu0
  %v1220 = vpop.trf.xlu0
  %v1221 = vpop.trf.xlu0
  %v1222 = vpop.trf.xlu0
  %v1223 = vpop.trf.xlu0
  %v1224 = vpop.trf.xlu0
  %v1225 = vpop.trf.xlu0
  %v1226 = vpop.trf.xlu0
  %v1227 = vpop.trf.xlu0
  %v1228 = vpop.trf.xlu0
  %v1229 = vpop.trf.xlu0
  %v1230 = vpop.trf.xlu0
  %v1231 = vpop.trf.xlu0
  %v1232 = vpop.trf.xlu0
  %v1234 = vsel %vm102, %v1217, 0
  %1236 = vmatprep.subr.mxu0 0.0
  %1237 = vmatpush1.msra.mxu0 0.0
  %1238 = vmatprep.subr.mxu0 0.0
  %1239 = vmatpush1.msra.mxu0 0.0
  %1240 = vmatprep.subr.mxu0 0.0
  %1241 = vmatpush1.msra.mxu0 0.0
  %1242 = vmatprep.subr.mxu0 0.0
  %1243 = vmatpush1.msra.mxu0 0.0
  %1244 = vmatprep.subr.mxu0 0.0
  %1245 = vmatpush1.msra.mxu0 0.0
  %1246 = vmatprep.subr.mxu0 0.0
  %1247 = vmatpush1.msra.mxu0 0.0
  %1248 = vmatprep.subr.mxu0 0.0
  %1249 = vmatpush1.msra.mxu0 0.0
  %1250 = vmatprep.subr.mxu0 0.0
  %1251 = vmatpush1.msra.mxu0 0.0
  %1252 = vmatprep.subr.mxu0 0.0
  %1253 = vmatpush1.msra.mxu0 0.0
  %1254 = vmatprep.subr.mxu0 0.0
  %1255 = vmatpush1.msra.mxu0 0.0
  %1256 = vmatprep.subr.mxu0 0.0
  %1257 = vmatpush1.msra.mxu0 0.0
  %1258 = vmatprep.subr.mxu0 0.0
  %1259 = vmatpush1.msra.mxu0 0.0
  %1260 = vmatprep.subr.mxu0 0.0
  %1261 = vmatpush1.msra.mxu0 %v332
  %1262 = vmatprep.subr.mxu0 0.0
  %1263 = vmatpush1.msra.mxu0 %v330
  %1264 = vmatprep.subr.mxu0 0.0
  %1265 = vmatpush1.msra.mxu0 %v328
  %1266 = vmatprep.subr.mxu0 0.0
  %1267 = vmatpush1.msra.mxu0 %v326
  %1268 = vmatprep.subr.mxu0 0.0
  %1269 = vmatpush2.msra.mxu0 0.0
  %1270 = vmatprep.subr.mxu0 0.0
  %1271 = vmatpush2.msra.mxu0 0.0
  %1272 = vmatprep.subr.mxu0 0.0
  %1273 = vmatpush2.msra.mxu0 0.0
  %1274 = vmatprep.subr.mxu0 0.0
  %1275 = vmatpush2.msra.mxu0 0.0
  %1276 = vmatprep.subr.mxu0 0.0
  %1277 = vmatpush2.msra.mxu0 0.0
  %1278 = vmatprep.subr.mxu0 0.0
  %1279 = vmatpush2.msra.mxu0 0.0
  %1280 = vmatprep.subr.mxu0 0.0
  %1281 = vmatpush2.msra.mxu0 0.0
  %1282 = vmatprep.subr.mxu0 0.0
  %1283 = vmatpush2.msra.mxu0 0.0
  %1284 = vmatprep.subr.mxu0 0.0
  %1285 = vmatpush2.msra.mxu0 0.0
  %1286 = vmatprep.subr.mxu0 0.0
  %1287 = vmatpush2.msra.mxu0 0.0
  %1288 = vmatprep.subr.mxu0 0.0
  %1289 = vmatpush2.msra.mxu0 0.0
  %1290 = vmatprep.subr.mxu0 0.0
  %1291 = vmatpush2.msra.mxu0 0.0
  %1292 = vmatprep.subr.mxu0 0.0
  %1293 = vmatpush2.msra.mxu0 0.0
  %1294 = vmatprep.subr.mxu0 0.0
  %1295 = vmatpush2.msra.mxu0 0.0
  %1296 = vmatprep.subr.mxu0 0.0
  %1297 = vmatpush2.msra.mxu0 0.0
  %1298 = vmatprep.subr.mxu0 0.0
  %1299 = vmatpush2.msra.mxu0 0.0
  %1300 = vmatprep.mubr.f32.mxu0 0.0
  %1301 = vmatmul.mubr.f32.gmra.mxu0 %v1234
  %v1302 = vpop.f32.mrf.mxu0
  %v1303 = vadd.f32 0.0, %v1302
  %v1304 = vpop.f32.mrf.mxu0
  %1305 = vdwg.mxu0
  %v1307 = vsel %vm102, %v1085, 0
  %1309 = vmatprep.subr.mxu0 0.0
  %1310 = vmatpush1.msra.mxu0 0.0
  %1311 = vmatprep.subr.mxu0 0.0
  %1312 = vmatpush1.msra.mxu0 0.0
  %1313 = vmatprep.subr.mxu0 0.0
  %1314 = vmatpush1.msra.mxu0 0.0
  %1315 = vmatprep.subr.mxu0 0.0
  %1316 = vmatpush1.msra.mxu0 0.0
  %1317 = vmatprep.subr.mxu0 0.0
  %1318 = vmatpush1.msra.mxu0 0.0
  %1319 = vmatprep.subr.mxu0 0.0
  %1320 = vmatpush1.msra.mxu0 0.0
  %1321 = vmatprep.subr.mxu0 0.0
  %1322 = vmatpush1.msra.mxu0 0.0
  %1323 = vmatprep.subr.mxu0 0.0
  %1324 = vmatpush1.msra.mxu0 0.0
  %1325 = vmatprep.subr.mxu0 0.0
  %1326 = vmatpush1.msra.mxu0 0.0
  %1327 = vmatprep.subr.mxu0 0.0
  %1328 = vmatpush1.msra.mxu0 0.0
  %1329 = vmatprep.subr.mxu0 0.0
  %1330 = vmatpush1.msra.mxu0 0.0
  %1331 = vmatprep.subr.mxu0 0.0
  %1332 = vmatpush1.msra.mxu0 0.0
  %1333 = vmatprep.subr.mxu0 0.0
  %1334 = vmatpush1.msra.mxu0 %v417
  %1335 = vmatprep.subr.mxu0 0.0
  %1336 = vmatpush1.msra.mxu0 %v415
  %1337 = vmatprep.subr.mxu0 0.0
  %1338 = vmatpush1.msra.mxu0 %v413
  %1339 = vmatprep.subr.mxu0 0.0
  %1340 = vmatpush1.msra.mxu0 %v411
  %1341 = vmatprep.subr.mxu0 0.0
  %1342 = vmatpush2.msra.mxu0 0.0
  %1343 = vmatprep.subr.mxu0 0.0
  %1344 = vmatpush2.msra.mxu0 0.0
  %1345 = vmatprep.subr.mxu0 0.0
  %1346 = vmatpush2.msra.mxu0 0.0
  %1347 = vmatprep.subr.mxu0 0.0
  %1348 = vmatpush2.msra.mxu0 0.0
  %1349 = vmatprep.subr.mxu0 0.0
  %1350 = vmatpush2.msra.mxu0 0.0
  %1351 = vmatprep.subr.mxu0 0.0
  %1352 = vmatpush2.msra.mxu0 0.0
  %1353 = vmatprep.subr.mxu0 0.0
  %1354 = vmatpush2.msra.mxu0 0.0
  %1355 = vmatprep.subr.mxu0 0.0
  %1356 = vmatpush2.msra.mxu0 0.0
  %1357 = vmatprep.subr.mxu0 0.0
  %1358 = vmatpush2.msra.mxu0 0.0
  %1359 = vmatprep.subr.mxu0 0.0
  %1360 = vmatpush2.msra.mxu0 0.0
  %1361 = vmatprep.subr.mxu0 0.0
  %1362 = vmatpush2.msra.mxu0 0.0
  %1363 = vmatprep.subr.mxu0 0.0
  %1364 = vmatpush2.msra.mxu0 0.0
  %1365 = vmatprep.subr.mxu0 0.0
  %1366 = vmatpush2.msra.mxu0 0.0
  %1367 = vmatprep.subr.mxu0 0.0
  %1368 = vmatpush2.msra.mxu0 0.0
  %1369 = vmatprep.subr.mxu0 0.0
  %1370 = vmatpush2.msra.mxu0 0.0
  %1371 = vmatprep.subr.mxu0 0.0
  %1372 = vmatpush2.msra.mxu0 0.0
  %1373 = vmatprep.mubr.f32.mxu0 0.0
  %1374 = vmatmul.mubr.f32.gmra.mxu0 %v1307
  %v1375 = vpop.f32.mrf.mxu0
  %v1376 = vadd.f32 0.0, %v1375
  %v1377 = vpop.f32.mrf.mxu0
  %1378 = vdwg.mxu0
  %1379 = vmatprep.subr.mxu0 0.0
  %1380 = vmatpush1.msra.mxu0 0.0
  %1381 = vmatprep.subr.mxu0 0.0
  %1382 = vmatpush1.msra.mxu0 0.0
  %1383 = vmatprep.subr.mxu0 0.0
  %1384 = vmatpush1.msra.mxu0 0.0
  %1385 = vmatprep.subr.mxu0 0.0
  %1386 = vmatpush1.msra.mxu0 0.0
  %1387 = vmatprep.subr.mxu0 0.0
  %1388 = vmatpush1.msra.mxu0 0.0
  %1389 = vmatprep.subr.mxu0 0.0
  %1390 = vmatpush1.msra.mxu0 0.0
  %1391 = vmatprep.subr.mxu0 0.0
  %1392 = vmatpush1.msra.mxu0 0.0
  %1393 = vmatprep.subr.mxu0 0.0
  %1394 = vmatpush1.msra.mxu0 0.0
  %1395 = vmatprep.subr.mxu0 0.0
  %1396 = vmatpush1.msra.mxu0 0.0
  %1397 = vmatprep.subr.mxu0 0.0
  %1398 = vmatpush1.msra.mxu0 0.0
  %1399 = vmatprep.subr.mxu0 0.0
  %1400 = vmatpush1.msra.mxu0 0.0
  %1401 = vmatprep.subr.mxu0 0.0
  %1402 = vmatpush1.msra.mxu0 0.0
  %1403 = vmatprep.subr.mxu0 0.0
  %1404 = vmatpush1.msra.mxu0 %v417
  %1405 = vmatprep.subr.mxu0 0.0
  %1406 = vmatpush1.msra.mxu0 %v415
  %1407 = vmatprep.subr.mxu0 0.0
  %1408 = vmatpush1.msra.mxu0 %v413
  %1409 = vmatprep.subr.mxu0 0.0
  %1410 = vmatpush1.msra.mxu0 %v411
  %1411 = vmatprep.subr.mxu0 0.0
  %1412 = vmatpush2.msra.mxu0 0.0
  %1413 = vmatprep.subr.mxu0 0.0
  %1414 = vmatpush2.msra.mxu0 0.0
  %1415 = vmatprep.subr.mxu0 0.0
  %1416 = vmatpush2.msra.mxu0 0.0
  %1417 = vmatprep.subr.mxu0 0.0
  %1418 = vmatpush2.msra.mxu0 0.0
  %1419 = vmatprep.subr.mxu0 0.0
  %1420 = vmatpush2.msra.mxu0 0.0
  %1421 = vmatprep.subr.mxu0 0.0
  %1422 = vmatpush2.msra.mxu0 0.0
  %1423 = vmatprep.subr.mxu0 0.0
  %1424 = vmatpush2.msra.mxu0 0.0
  %1425 = vmatprep.subr.mxu0 0.0
  %1426 = vmatpush2.msra.mxu0 0.0
  %1427 = vmatprep.subr.mxu0 0.0
  %1428 = vmatpush2.msra.mxu0 0.0
  %1429 = vmatprep.subr.mxu0 0.0
  %1430 = vmatpush2.msra.mxu0 0.0
  %1431 = vmatprep.subr.mxu0 0.0
  %1432 = vmatpush2.msra.mxu0 0.0
  %1433 = vmatprep.subr.mxu0 0.0
  %1434 = vmatpush2.msra.mxu0 0.0
  %1435 = vmatprep.subr.mxu0 0.0
  %1436 = vmatpush2.msra.mxu0 0.0
  %1437 = vmatprep.subr.mxu0 0.0
  %1438 = vmatpush2.msra.mxu0 0.0
  %1439 = vmatprep.subr.mxu0 0.0
  %1440 = vmatpush2.msra.mxu0 0.0
  %1441 = vmatprep.subr.mxu0 0.0
  %1442 = vmatpush2.msra.mxu0 0.0
  %1443 = vmatprep.mubr.f32.mxu0 0.0
  %1444 = vmatmul.mubr.f32.gmra.mxu0 %v1234
  %v1445 = vpop.f32.mrf.mxu0
  %v1446 = vadd.f32 %v1376, %v1445
  %v1447 = vpop.f32.mrf.mxu0
  %1448 = vdwg.mxu0
  %vm1449 = vcmp.gt.f32.partialorder %v1193, 0.0
  %vm1450 = vcmp.gt.f32.partialorder %v1198, 0.0
  %v1451 = vadd.f32 %v1193, 1.0
  %v1452 = vadd.f32 %v1198, 1.0
  %v1453 = vmul.f32 %v1193, 1.442695
  %v1454 = vpow.pop %v1453
  %v1455 = vmul.f32 %v1198, 1.442695
  %v1456 = vpow.pop %v1455
  %v1457 = vsel %vm1449, %v1451, %v1454
  %v1458 = vsel %vm1450, %v1452, %v1456
  %vm1459 = vcmp.gt.f32.partialorder %v1303, 0.0
  %v1460 = vadd.f32 %v1303, 1.0
  %v1461 = vmul.f32 %v1303, 1.442695
  %v1462 = vpow.pop %v1461
  %v1463 = vsel %vm1459, %v1460, %v1462
  %v1464 = vmul.f32 %v1446, 0.125
  %1465 = vxpose.xlu0.b32.start [1/16] %v1463, 128
  %1466 = vxpose.xlu0.b32.cont [2/16] 0.0, 128
  %1467 = vxpose.xlu0.b32.cont [3/16] 0.0, 128
  %1468 = vxpose.xlu0.b32.cont [4/16] 0.0, 128
  %1469 = vxpose.xlu0.b32.cont [5/16] 0.0, 128
  %1470 = vxpose.xlu0.b32.cont [6/16] 0.0, 128
  %1471 = vxpose.xlu0.b32.cont [7/16] 0.0, 128
  %1472 = vxpose.xlu0.b32.cont [8/16] 0.0, 128
  %1473 = vxpose.xlu0.b32.cont [9/16] 0.0, 128
  %1474 = vxpose.xlu0.b32.cont [10/16] 0.0, 128
  %1475 = vxpose.xlu0.b32.cont [11/16] 0.0, 128
  %1476 = vxpose.xlu0.b32.cont [12/16] 0.0, 128
  %1477 = vxpose.xlu0.b32.cont [13/16] 0.0, 128
  %1478 = vxpose.xlu0.b32.cont [14/16] 0.0, 128
  %1479 = vxpose.xlu0.b32.cont [15/16] 0.0, 128
  %1480 = vxpose.xlu0.b32.end [16/16] 0.0, 128
  %v1481 = vpop.trf.xlu0
  %v1482 = vpop.trf.xlu0
  %v1483 = vpop.trf.xlu0
  %v1484 = vpop.trf.xlu0
  %v1485 = vpop.trf.xlu0
  %v1486 = vpop.trf.xlu0
  %v1487 = vpop.trf.xlu0
  %v1488 = vpop.trf.xlu0
  %v1489 = vpop.trf.xlu0
  %v1490 = vpop.trf.xlu0
  %v1491 = vpop.trf.xlu0
  %v1492 = vpop.trf.xlu0
  %v1493 = vpop.trf.xlu0
  %v1494 = vpop.trf.xlu0
  %v1495 = vpop.trf.xlu0
  %v1496 = vpop.trf.xlu0
  %v1498 = vsel %vm613, %v1481, 0
  %v1501 = vsel %vm613, %v1482, 0
  %v1504 = vsel %vm613, %v1483, 0
  %v1507 = vsel %vm613, %v1484, 0
  %1509 = vmatprep.subr.mxu0 0.0
  %1510 = vmatpush1.msra.mxu0 0.0
  %1511 = vmatprep.subr.mxu0 0.0
  %1512 = vmatpush1.msra.mxu0 0.0
  %1513 = vmatprep.subr.mxu0 0.0
  %1514 = vmatpush1.msra.mxu0 0.0
  %1515 = vmatprep.subr.mxu0 0.0
  %1516 = vmatpush1.msra.mxu0 0.0
  %1517 = vmatprep.subr.mxu0 0.0
  %1518 = vmatpush1.msra.mxu0 0.0
  %1519 = vmatprep.subr.mxu0 0.0
  %1520 = vmatpush1.msra.mxu0 0.0
  %1521 = vmatprep.subr.mxu0 0.0
  %1522 = vmatpush1.msra.mxu0 0.0
  %1523 = vmatprep.subr.mxu0 0.0
  %1524 = vmatpush1.msra.mxu0 0.0
  %1525 = vmatprep.subr.mxu0 0.0
  %1526 = vmatpush1.msra.mxu0 0.0
  %1527 = vmatprep.subr.mxu0 0.0
  %1528 = vmatpush1.msra.mxu0 0.0
  %1529 = vmatprep.subr.mxu0 0.0
  %1530 = vmatpush1.msra.mxu0 0.0
  %1531 = vmatprep.subr.mxu0 0.0
  %1532 = vmatpush1.msra.mxu0 0.0
  %1533 = vmatprep.subr.mxu0 0.0
  %1534 = vmatpush1.msra.mxu0 0.0
  %1535 = vmatprep.subr.mxu0 0.0
  %1536 = vmatpush1.msra.mxu0 0.0
  %1537 = vmatprep.subr.mxu0 0.0
  %1538 = vmatpush1.msra.mxu0 0.0
  %1539 = vmatprep.subr.mxu0 0.0
  %1540 = vmatpush1.msra.mxu0 %v1464
  %1541 = vmatprep.subr.mxu0 0.0
  %1542 = vmatpush2.msra.mxu0 0.0
  %1543 = vmatprep.subr.mxu0 0.0
  %1544 = vmatpush2.msra.mxu0 0.0
  %1545 = vmatprep.subr.mxu0 0.0
  %1546 = vmatpush2.msra.mxu0 0.0
  %1547 = vmatprep.subr.mxu0 0.0
  %1548 = vmatpush2.msra.mxu0 0.0
  %1549 = vmatprep.subr.mxu0 0.0
  %1550 = vmatpush2.msra.mxu0 0.0
  %1551 = vmatprep.subr.mxu0 0.0
  %1552 = vmatpush2.msra.mxu0 0.0
  %1553 = vmatprep.subr.mxu0 0.0
  %1554 = vmatpush2.msra.mxu0 0.0
  %1555 = vmatprep.subr.mxu0 0.0
  %1556 = vmatpush2.msra.mxu0 0.0
  %1557 = vmatprep.subr.mxu0 0.0
  %1558 = vmatpush2.msra.mxu0 0.0
  %1559 = vmatprep.subr.mxu0 0.0
  %1560 = vmatpush2.msra.mxu0 0.0
  %1561 = vmatprep.subr.mxu0 0.0
  %1562 = vmatpush2.msra.mxu0 0.0
  %1563 = vmatprep.subr.mxu0 0.0
  %1564 = vmatpush2.msra.mxu0 0.0
  %1565 = vmatprep.subr.mxu0 0.0
  %1566 = vmatpush2.msra.mxu0 0.0
  %1567 = vmatprep.subr.mxu0 0.0
  %1568 = vmatpush2.msra.mxu0 0.0
  %1569 = vmatprep.subr.mxu0 0.0
  %1570 = vmatpush2.msra.mxu0 0.0
  %1571 = vmatprep.subr.mxu0 0.0
  %1572 = vmatpush2.msra.mxu0 0.0
  %1573 = vmatprep.mubr.f32.mxu0 0.0
  %1574 = vmatmul.mubr.f32.gmra.mxu0 %v1498
  %v1575 = vpop.f32.mrf.mxu0
  %v1576 = vadd.f32 0.0, %v1575
  %v1577 = vpop.f32.mrf.mxu0
  %1578 = vmatprep.mubr.f32.mxu0 0.0
  %1579 = vmatmul.mubr.f32.gmra.mxu0 %v1501
  %v1580 = vpop.f32.mrf.mxu0
  %v1581 = vadd.f32 0.0, %v1580
  %v1582 = vpop.f32.mrf.mxu0
  %1583 = vmatprep.mubr.f32.mxu0 0.0
  %1584 = vmatmul.mubr.f32.gmra.mxu0 %v1504
  %v1585 = vpop.f32.mrf.mxu0
  %v1586 = vadd.f32 0.0, %v1585
  %v1587 = vpop.f32.mrf.mxu0
  %1588 = vmatprep.mubr.f32.mxu0 0.0
  %1589 = vmatmul.mubr.f32.gmra.mxu0 %v1507
  %v1590 = vpop.f32.mrf.mxu0
  %v1591 = vadd.f32 0.0, %v1590
  %v1592 = vpop.f32.mrf.mxu0
  %1593 = vdwg.mxu0
  %v1594 = vmul.f32 %v1576, %v716
  %v1595 = vmul.f32 %v1581, %v718
  %v1596 = vmul.f32 %v1586, %v720
  %v1597 = vmul.f32 %v1591, %v722
  %v1598 = vsel %vm102, %v1463, 0.0
  %v1599 = vrot.slane %v1598, 4
  %v1600 = vadd.f32 %v1598, %v1599
  %v1601 = vrot.slane %v1600, 2
  %v1602 = vadd.f32 %v1600, %v1601
  %v1603 = vrot.slane %v1602, 1
  %v1604 = vadd.f32 %v1602, %v1603
  %v1606 = vsel %vm102, %v1457, 0
  %v1609 = vsel %vm102, %v1458, 0
  %1611 = vmatprep.subr.mxu0 0.0
  %1612 = vmatpush1.msra.mxu0 0.0
  %1613 = vmatprep.subr.mxu0 0.0
  %1614 = vmatpush1.msra.mxu0 0.0
  %1615 = vmatprep.subr.mxu0 0.0
  %1616 = vmatpush1.msra.mxu0 0.0
  %1617 = vmatprep.subr.mxu0 0.0
  %1618 = vmatpush1.msra.mxu0 0.0
  %1619 = vmatprep.subr.mxu0 0.0
  %1620 = vmatpush1.msra.mxu0 0.0
  %1621 = vmatprep.subr.mxu0 0.0
  %1622 = vmatpush1.msra.mxu0 0.0
  %1623 = vmatprep.subr.mxu0 0.0
  %1624 = vmatpush1.msra.mxu0 0.0
  %1625 = vmatprep.subr.mxu0 0.0
  %1626 = vmatpush1.msra.mxu0 0.0
  %1627 = vmatprep.subr.mxu0 0.0
  %1628 = vmatpush1.msra.mxu0 0.0
  %1629 = vmatprep.subr.mxu0 0.0
  %1630 = vmatpush1.msra.mxu0 0.0
  %1631 = vmatprep.subr.mxu0 0.0
  %1632 = vmatpush1.msra.mxu0 0.0
  %1633 = vmatprep.subr.mxu0 0.0
  %1634 = vmatpush1.msra.mxu0 0.0
  %1635 = vmatprep.subr.mxu0 0.0
  %1636 = vmatpush1.msra.mxu0 %v1597
  %1637 = vmatprep.subr.mxu0 0.0
  %1638 = vmatpush1.msra.mxu0 %v1596
  %1639 = vmatprep.subr.mxu0 0.0
  %1640 = vmatpush1.msra.mxu0 %v1595
  %1641 = vmatprep.subr.mxu0 0.0
  %1642 = vmatpush1.msra.mxu0 %v1594
  %1643 = vmatprep.subr.mxu0 0.0
  %1644 = vmatpush2.msra.mxu0 0.0
  %1645 = vmatprep.subr.mxu0 0.0
  %1646 = vmatpush2.msra.mxu0 0.0
  %1647 = vmatprep.subr.mxu0 0.0
  %1648 = vmatpush2.msra.mxu0 0.0
  %1649 = vmatprep.subr.mxu0 0.0
  %1650 = vmatpush2.msra.mxu0 0.0
  %1651 = vmatprep.subr.mxu0 0.0
  %1652 = vmatpush2.msra.mxu0 0.0
  %1653 = vmatprep.subr.mxu0 0.0
  %1654 = vmatpush2.msra.mxu0 0.0
  %1655 = vmatprep.subr.mxu0 0.0
  %1656 = vmatpush2.msra.mxu0 0.0
  %1657 = vmatprep.subr.mxu0 0.0
  %1658 = vmatpush2.msra.mxu0 0.0
  %1659 = vmatprep.subr.mxu0 0.0
  %1660 = vmatpush2.msra.mxu0 0.0
  %1661 = vmatprep.subr.mxu0 0.0
  %1662 = vmatpush2.msra.mxu0 0.0
  %1663 = vmatprep.subr.mxu0 0.0
  %1664 = vmatpush2.msra.mxu0 0.0
  %1665 = vmatprep.subr.mxu0 0.0
  %1666 = vmatpush2.msra.mxu0 0.0
  %1667 = vmatprep.subr.mxu0 0.0
  %1668 = vmatpush2.msra.mxu0 0.0
  %1669 = vmatprep.subr.mxu0 0.0
  %1670 = vmatpush2.msra.mxu0 0.0
  %1671 = vmatprep.subr.mxu0 0.0
  %1672 = vmatpush2.msra.mxu0 0.0
  %1673 = vmatprep.subr.mxu0 0.0
  %1674 = vmatpush2.msra.mxu0 0.0
  %1675 = vmatprep.mubr.f32.mxu0 0.0
  %1676 = vmatmul.mubr.f32.gmra.mxu0 %v1606
  %v1677 = vpop.f32.mrf.mxu0
  %v1678 = vadd.f32 0.0, %v1677
  %v1679 = vpop.f32.mrf.mxu0
  %1680 = vmatprep.mubr.f32.mxu0 0.0
  %1681 = vmatmul.mubr.f32.gmra.mxu0 %v1609
  %v1682 = vpop.f32.mrf.mxu0
  %v1683 = vadd.f32 0.0, %v1682
  %v1684 = vpop.f32.mrf.mxu0
  %1685 = vdwg.mxu0
  %v1686 = vmul.f32 %v1457, %v1604
  %v1687 = vmul.f32 %v1458, %v1604
  %v1689 = vsel %vm102, %v1686, 0
  %v1692 = vsel %vm102, %v1687, 0
  %1694 = vmatprep.subr.mxu0 0.0
  %1695 = vmatpush1.msra.mxu0 0.0
  %1696 = vmatprep.subr.mxu0 0.0
  %1697 = vmatpush1.msra.mxu0 0.0
  %1698 = vmatprep.subr.mxu0 0.0
  %1699 = vmatpush1.msra.mxu0 0.0
  %1700 = vmatprep.subr.mxu0 0.0
  %1701 = vmatpush1.msra.mxu0 0.0
  %1702 = vmatprep.subr.mxu0 0.0
  %1703 = vmatpush1.msra.mxu0 0.0
  %1704 = vmatprep.subr.mxu0 0.0
  %1705 = vmatpush1.msra.mxu0 0.0
  %1706 = vmatprep.subr.mxu0 0.0
  %1707 = vmatpush1.msra.mxu0 0.0
  %1708 = vmatprep.subr.mxu0 0.0
  %1709 = vmatpush1.msra.mxu0 0.0
  %1710 = vmatprep.subr.mxu0 0.0
  %1711 = vmatpush1.msra.mxu0 0.0
  %1712 = vmatprep.subr.mxu0 0.0
  %1713 = vmatpush1.msra.mxu0 0.0
  %1714 = vmatprep.subr.mxu0 0.0
  %1715 = vmatpush1.msra.mxu0 0.0
  %1716 = vmatprep.subr.mxu0 0.0
  %1717 = vmatpush1.msra.mxu0 0.0
  %1718 = vmatprep.subr.mxu0 0.0
  %1719 = vmatpush1.msra.mxu0 %v722
  %1720 = vmatprep.subr.mxu0 0.0
  %1721 = vmatpush1.msra.mxu0 %v720
  %1722 = vmatprep.subr.mxu0 0.0
  %1723 = vmatpush1.msra.mxu0 %v718
  %1724 = vmatprep.subr.mxu0 0.0
  %1725 = vmatpush1.msra.mxu0 %v716
  %1726 = vmatprep.subr.mxu0 0.0
  %1727 = vmatpush2.msra.mxu0 0.0
  %1728 = vmatprep.subr.mxu0 0.0
  %1729 = vmatpush2.msra.mxu0 0.0
  %1730 = vmatprep.subr.mxu0 0.0
  %1731 = vmatpush2.msra.mxu0 0.0
  %1732 = vmatprep.subr.mxu0 0.0
  %1733 = vmatpush2.msra.mxu0 0.0
  %1734 = vmatprep.subr.mxu0 0.0
  %1735 = vmatpush2.msra.mxu0 0.0
  %1736 = vmatprep.subr.mxu0 0.0
  %1737 = vmatpush2.msra.mxu0 0.0
  %1738 = vmatprep.subr.mxu0 0.0
  %1739 = vmatpush2.msra.mxu0 0.0
  %1740 = vmatprep.subr.mxu0 0.0
  %1741 = vmatpush2.msra.mxu0 0.0
  %1742 = vmatprep.subr.mxu0 0.0
  %1743 = vmatpush2.msra.mxu0 0.0
  %1744 = vmatprep.subr.mxu0 0.0
  %1745 = vmatpush2.msra.mxu0 0.0
  %1746 = vmatprep.subr.mxu0 0.0
  %1747 = vmatpush2.msra.mxu0 0.0
  %1748 = vmatprep.subr.mxu0 0.0
  %1749 = vmatpush2.msra.mxu0 0.0
  %1750 = vmatprep.subr.mxu0 0.0
  %1751 = vmatpush2.msra.mxu0 0.0
  %1752 = vmatprep.subr.mxu0 0.0
  %1753 = vmatpush2.msra.mxu0 0.0
  %1754 = vmatprep.subr.mxu0 0.0
  %1755 = vmatpush2.msra.mxu0 0.0
  %1756 = vmatprep.subr.mxu0 0.0
  %1757 = vmatpush2.msra.mxu0 0.0
  %1758 = vmatprep.mubr.f32.mxu0 0.0
  %1759 = vmatmul.mubr.f32.gmra.mxu0 %v1689
  %v1760 = vpop.f32.mrf.mxu0
  %v1761 = vadd.f32 1e-06, %v1760
  %v1762 = vpop.f32.mrf.mxu0
  %1763 = vmatprep.mubr.f32.mxu0 0.0
  %1764 = vmatmul.mubr.f32.gmra.mxu0 %v1692
  %v1765 = vpop.f32.mrf.mxu0
  %v1766 = vadd.f32 1e-06, %v1765
  %v1767 = vpop.f32.mrf.mxu0
  %1768 = vdwg.mxu0
  %v1769 = vrcp.pop %v1761
  %v1770 = vmul.f32 8.0, %v1769
  %v1771 = vrcp.pop %v1766
  %v1772 = vmul.f32 8.0, %v1771
  %v1773 = vmul.f32 %v1678, %v1770
  %v1774 = vmul.f32 %v1683, %v1772
  %1775 = vmatprep.subr.mxu0 0.0
  %1776 = vmatpush1.msra.mxu0 0.0
  %1777 = vmatprep.subr.mxu0 0.0
  %1778 = vmatpush1.msra.mxu0 0.0
  %1779 = vmatprep.subr.mxu0 0.0
  %1780 = vmatpush1.msra.mxu0 0.0
  %1781 = vmatprep.subr.mxu0 0.0
  %1782 = vmatpush1.msra.mxu0 0.0
  %1783 = vmatprep.subr.mxu0 0.0
  %1784 = vmatpush1.msra.mxu0 0.0
  %1785 = vmatprep.subr.mxu0 0.0
  %1786 = vmatpush1.msra.mxu0 0.0
  %1787 = vmatprep.subr.mxu0 0.0
  %1788 = vmatpush1.msra.mxu0 0.0
  %1789 = vmatprep.subr.mxu0 0.0
  %1790 = vmatpush1.msra.mxu0 0.0
  %1791 = vmatprep.subr.mxu0 0.0
  %1792 = vmatpush1.msra.mxu0 0.0
  %1793 = vmatprep.subr.mxu0 0.0
  %1794 = vmatpush1.msra.mxu0 0.0
  %1795 = vmatprep.subr.mxu0 0.0
  %1796 = vmatpush1.msra.mxu0 0.0
  %1797 = vmatprep.subr.mxu0 0.0
  %1798 = vmatpush1.msra.mxu0 0.0
  %1799 = vmatprep.subr.mxu0 0.0
  %1800 = vmatpush1.msra.mxu0 %v30
  %1801 = vmatprep.subr.mxu0 0.0
  %1802 = vmatpush1.msra.mxu0 %v29
  %1803 = vmatprep.subr.mxu0 0.0
  %1804 = vmatpush1.msra.mxu0 %v28
  %1805 = vmatprep.subr.mxu0 0.0
  %1806 = vmatpush1.msra.mxu0 %v27
  %1807 = vmatprep.subr.mxu0 0.0
  %1808 = vmatpush2.msra.mxu0 0.0
  %1809 = vmatprep.subr.mxu0 0.0
  %1810 = vmatpush2.msra.mxu0 0.0
  %1811 = vmatprep.subr.mxu0 0.0
  %1812 = vmatpush2.msra.mxu0 0.0
  %1813 = vmatprep.subr.mxu0 0.0
  %1814 = vmatpush2.msra.mxu0 0.0
  %1815 = vmatprep.subr.mxu0 0.0
  %1816 = vmatpush2.msra.mxu0 0.0
  %1817 = vmatprep.subr.mxu0 0.0
  %1818 = vmatpush2.msra.mxu0 0.0
  %1819 = vmatprep.subr.mxu0 0.0
  %1820 = vmatpush2.msra.mxu0 0.0
  %1821 = vmatprep.subr.mxu0 0.0
  %1822 = vmatpush2.msra.mxu0 0.0
  %1823 = vmatprep.subr.mxu0 0.0
  %1824 = vmatpush2.msra.mxu0 0.0
  %1825 = vmatprep.subr.mxu0 0.0
  %1826 = vmatpush2.msra.mxu0 0.0
  %1827 = vmatprep.subr.mxu0 0.0
  %1828 = vmatpush2.msra.mxu0 0.0
  %1829 = vmatprep.subr.mxu0 0.0
  %1830 = vmatpush2.msra.mxu0 0.0
  %1831 = vmatprep.subr.mxu0 0.0
  %1832 = vmatpush2.msra.mxu0 0.0
  %1833 = vmatprep.subr.mxu0 0.0
  %1834 = vmatpush2.msra.mxu0 0.0
  %1835 = vmatprep.subr.mxu0 0.0
  %1836 = vmatpush2.msra.mxu0 0.0
  %1837 = vmatprep.subr.mxu0 0.0
  %1838 = vmatpush2.msra.mxu0 0.0
  %1839 = vmatprep.mubr.f32.mxu0 0.0
  %1840 = vmatmul.mubr.f32.gmra.mxu0 %v1121
  %v1841 = vpop.f32.mrf.mxu0
  %v1842 = vadd.f32 0.0, %v1841
  %v1843 = vpop.f32.mrf.mxu0
  %1844 = vmatprep.mubr.f32.mxu0 0.0
  %1845 = vmatmul.mubr.f32.gmra.mxu0 %v1124
  %v1846 = vpop.f32.mrf.mxu0
  %v1847 = vadd.f32 0.0, %v1846
  %v1848 = vpop.f32.mrf.mxu0
  %1849 = vdwg.mxu0
  %1850 = vrot.lane.b32.xlu0 %v23, 32
  %v1851 = vpop.permute.xlu0 %1850
  %1852 = vrot.lane.b32.xlu0 %v24, 32
  %v1853 = vpop.permute.xlu0 %1852
  %1854 = vrot.lane.b32.xlu0 %v25, 32
  %v1855 = vpop.permute.xlu0 %1854
  %1856 = vrot.lane.b32.xlu0 %v26, 32
  %v1857 = vpop.permute.xlu0 %1856
  %v1863 = vsel %vm102, %v906, 0
  %v1866 = vsel %vm102, %v907, 0
  %v1869 = vsel %vm102, %v1773, 0
  %v1872 = vsel %vm102, %v1774, 0
  %1874 = vmatprep.subr.mxu0 0.0
  %1875 = vmatpush1.msra.mxu0 0.0
  %1876 = vmatprep.subr.mxu0 0.0
  %1877 = vmatpush1.msra.mxu0 0.0
  %1878 = vmatprep.subr.mxu0 0.0
  %1879 = vmatpush1.msra.mxu0 0.0
  %1880 = vmatprep.subr.mxu0 0.0
  %1881 = vmatpush1.msra.mxu0 0.0
  %1882 = vmatprep.subr.mxu0 0.0
  %1883 = vmatpush1.msra.mxu0 0.0
  %1884 = vmatprep.subr.mxu0 0.0
  %1885 = vmatpush1.msra.mxu0 0.0
  %1886 = vmatprep.subr.mxu0 0.0
  %1887 = vmatpush1.msra.mxu0 0.0
  %1888 = vmatprep.subr.mxu0 0.0
  %1889 = vmatpush1.msra.mxu0 0.0
  %1890 = vmatprep.subr.mxu0 0.0
  %1891 = vmatpush1.msra.mxu0 0.0
  %1892 = vmatprep.subr.mxu0 0.0
  %1893 = vmatpush1.msra.mxu0 0.0
  %1894 = vmatprep.subr.mxu0 0.0
  %1895 = vmatpush1.msra.mxu0 0.0
  %1896 = vmatprep.subr.mxu0 0.0
  %1897 = vmatpush1.msra.mxu0 0.0
  %1898 = vmatprep.subr.mxu0 0.0
  %1899 = vmatpush1.msra.mxu0 %v1857
  %1900 = vmatprep.subr.mxu0 0.0
  %1901 = vmatpush1.msra.mxu0 %v1855
  %1902 = vmatprep.subr.mxu0 0.0
  %1903 = vmatpush1.msra.mxu0 %v1853
  %1904 = vmatprep.subr.mxu0 0.0
  %1905 = vmatpush1.msra.mxu0 %v1851
  %1906 = vmatprep.subr.mxu0 0.0
  %1907 = vmatpush2.msra.mxu0 0.0
  %1908 = vmatprep.subr.mxu0 0.0
  %1909 = vmatpush2.msra.mxu0 0.0
  %1910 = vmatprep.subr.mxu0 0.0
  %1911 = vmatpush2.msra.mxu0 0.0
  %1912 = vmatprep.subr.mxu0 0.0
  %1913 = vmatpush2.msra.mxu0 0.0
  %1914 = vmatprep.subr.mxu0 0.0
  %1915 = vmatpush2.msra.mxu0 0.0
  %1916 = vmatprep.subr.mxu0 0.0
  %1917 = vmatpush2.msra.mxu0 0.0
  %1918 = vmatprep.subr.mxu0 0.0
  %1919 = vmatpush2.msra.mxu0 0.0
  %1920 = vmatprep.subr.mxu0 0.0
  %1921 = vmatpush2.msra.mxu0 0.0
  %1922 = vmatprep.subr.mxu0 0.0
  %1923 = vmatpush2.msra.mxu0 0.0
  %1924 = vmatprep.subr.mxu0 0.0
  %1925 = vmatpush2.msra.mxu0 0.0
  %1926 = vmatprep.subr.mxu0 0.0
  %1927 = vmatpush2.msra.mxu0 0.0
  %1928 = vmatprep.subr.mxu0 0.0
  %1929 = vmatpush2.msra.mxu0 0.0
  %1930 = vmatprep.subr.mxu0 0.0
  %1931 = vmatpush2.msra.mxu0 0.0
  %1932 = vmatprep.subr.mxu0 0.0
  %1933 = vmatpush2.msra.mxu0 0.0
  %1934 = vmatprep.subr.mxu0 0.0
  %1935 = vmatpush2.msra.mxu0 0.0
  %1936 = vmatprep.subr.mxu0 0.0
  %1937 = vmatpush2.msra.mxu0 0.0
  %1938 = vmatprep.mubr.f32.mxu0 0.0
  %1939 = vmatmul.mubr.f32.gmra.mxu0 %v1863
  %v1940 = vpop.f32.mrf.mxu0
  %v1941 = vadd.f32 0.0, %v1940
  %v1942 = vpop.f32.mrf.mxu0
  %1943 = vmatprep.mubr.f32.mxu0 0.0
  %1944 = vmatmul.mubr.f32.gmra.mxu0 %v1866
  %v1945 = vpop.f32.mrf.mxu0
  %v1946 = vadd.f32 0.0, %v1945
  %v1947 = vpop.f32.mrf.mxu0
  %1948 = vmatprep.mubr.f32.mxu0 0.0
  %1949 = vmatmul.mubr.f32.gmra.mxu0 %v1869
  %v1950 = vpop.f32.mrf.mxu0
  %v1951 = vadd.f32 0.0, %v1950
  %v1952 = vpop.f32.mrf.mxu0
  %1953 = vmatprep.mubr.f32.mxu0 0.0
  %1954 = vmatmul.mubr.f32.gmra.mxu0 %v1872
  %v1955 = vpop.f32.mrf.mxu0
  %v1956 = vadd.f32 0.0, %v1955
  %v1957 = vpop.f32.mrf.mxu0
  %1958 = vdwg.mxu0
  %v1959 = vsel %vm102, %v1941, 0.0
  %1960 = vadd.xlane.f32.xlu0 %v1959
  %v1961 = vpop.xlane.xlu0 %1960
  %v1962 = vsel %vm102, %v1946, 0.0
  %1963 = vadd.xlane.f32.xlu0 %v1962
  %v1964 = vpop.xlane.xlu0 %1963
  %v1965 = vsel %vm102, %v1951, 0.0
  %1966 = vadd.xlane.f32.xlu0 %v1965
  %v1967 = vpop.xlane.xlu0 %1966
  %v1968 = vsel %vm102, %v1956, 0.0
  %1969 = vadd.xlane.f32.xlu0 %v1968
  %v1970 = vpop.xlane.xlu0 %1969
  %v1971 = vrcp.pop 32.0
  %v1972 = vmul.f32 %v1961, %v1971
  %v1973 = vmul.f32 %v1964, %v1971
  %v1974 = vmul.f32 %v1967, %v1971
  %v1975 = vmul.f32 %v1970, %v1971
  %v1976 = vsub.f32 %v1941, %v1972
  %v1977 = vsub.f32 %v1946, %v1973
  %v1978 = vsub.f32 %v1951, %v1974
  %v1979 = vsub.f32 %v1956, %v1975
  %v1980 = vmul.f32 %v1976, %v1976
  %v1981 = vmul.f32 %v1977, %v1977
  %v1982 = vmul.f32 %v1978, %v1978
  %v1983 = vmul.f32 %v1979, %v1979
  %v1984 = vsel %vm102, %v1980, 0.0
  %1985 = vadd.xlane.f32.xlu0 %v1984
  %v1986 = vpop.xlane.xlu0 %1985
  %v1987 = vsel %vm102, %v1981, 0.0
  %1988 = vadd.xlane.f32.xlu0 %v1987
  %v1989 = vpop.xlane.xlu0 %1988
  %v1990 = vsel %vm102, %v1982, 0.0
  %1991 = vadd.xlane.f32.xlu0 %v1990
  %v1992 = vpop.xlane.xlu0 %1991
  %v1993 = vsel %vm102, %v1983, 0.0
  %1994 = vadd.xlane.f32.xlu0 %v1993
  %v1995 = vpop.xlane.xlu0 %1994
  %v1996 = vmul.f32 %v1986, %v1971
  %v1997 = vmul.f32 %v1989, %v1971
  %v1998 = vmul.f32 %v1992, %v1971
  %v1999 = vmul.f32 %v1995, %v1971
  %v2000 = vadd.f32 %v1996, 1e-05
  %v2001 = vadd.f32 %v1997, 1e-05
  %v2002 = vadd.f32 %v1998, 1e-05
  %v2003 = vadd.f32 %v1999, 1e-05
  %v2004 = vrsqrt.pop %v2000
  %v2005 = vrsqrt.pop %v2001
  %v2006 = vrsqrt.pop %v2002
  %v2007 = vrsqrt.pop %v2003
  %v2008 = vmul.f32 %v1976, %v2004
  %v2009 = vmul.f32 %v1977, %v2005
  %v2010 = vmul.f32 %v1978, %v2006
  %v2011 = vmul.f32 %v1979, %v2007
  %v2012 = vlaneseq
  %v2013 = vshrl.u32 %v2012, 7
  %v2014 = vsub.s32 5, %v2013
  %v2015 = vrot.slane %v35, %v2014
  %v2016 = vmul.f32 %v2008, %v2015
  %v2017 = vmul.f32 %v2009, %v2015
  %v2018 = vmul.f32 %v2010, %v2015
  %v2019 = vmul.f32 %v2011, %v2015
  %v2020 = vlaneseq
  %v2021 = vshrl.u32 %v2020, 7
  %v2022 = vsub.s32 6, %v2021
  %v2023 = vrot.slane %v35, %v2022
  %v2024 = vadd.f32 %v2016, %v2023
  %v2025 = vadd.f32 %v2017, %v2023
  %v2026 = vadd.f32 %v2018, %v2023
  %v2027 = vadd.f32 %v2019, %v2023
  %v2029 = vsel %vm102, %v2024, 0
  %v2032 = vsel %vm102, %v2025, 0
  %v2035 = vsel %vm102, %v2026, 0
  %v2038 = vsel %vm102, %v2027, 0
  %2040 = vmatprep.subr.mxu0 0.0
  %2041 = vmatpush1.msra.mxu0 0.0
  %2042 = vmatprep.subr.mxu0 0.0
  %2043 = vmatpush1.msra.mxu0 0.0
  %2044 = vmatprep.subr.mxu0 0.0
  %2045 = vmatpush1.msra.mxu0 0.0
  %2046 = vmatprep.subr.mxu0 0.0
  %2047 = vmatpush1.msra.mxu0 0.0
  %2048 = vmatprep.subr.mxu0 0.0
  %2049 = vmatpush1.msra.mxu0 0.0
  %2050 = vmatprep.subr.mxu0 0.0
  %2051 = vmatpush1.msra.mxu0 0.0
  %2052 = vmatprep.subr.mxu0 0.0
  %2053 = vmatpush1.msra.mxu0 0.0
  %2054 = vmatprep.subr.mxu0 0.0
  %2055 = vmatpush1.msra.mxu0 0.0
  %2056 = vmatprep.subr.mxu0 0.0
  %2057 = vmatpush1.msra.mxu0 0.0
  %2058 = vmatprep.subr.mxu0 0.0
  %2059 = vmatpush1.msra.mxu0 0.0
  %2060 = vmatprep.subr.mxu0 0.0
  %2061 = vmatpush1.msra.mxu0 0.0
  %2062 = vmatprep.subr.mxu0 0.0
  %2063 = vmatpush1.msra.mxu0 0.0
  %2064 = vmatprep.subr.mxu0 0.0
  %2065 = vmatpush1.msra.mxu0 %v34
  %2066 = vmatprep.subr.mxu0 0.0
  %2067 = vmatpush1.msra.mxu0 %v33
  %2068 = vmatprep.subr.mxu0 0.0
  %2069 = vmatpush1.msra.mxu0 %v32
  %2070 = vmatprep.subr.mxu0 0.0
  %2071 = vmatpush1.msra.mxu0 %v31
  %2072 = vmatprep.subr.mxu0 0.0
  %2073 = vmatpush2.msra.mxu0 0.0
  %2074 = vmatprep.subr.mxu0 0.0
  %2075 = vmatpush2.msra.mxu0 0.0
  %2076 = vmatprep.subr.mxu0 0.0
  %2077 = vmatpush2.msra.mxu0 0.0
  %2078 = vmatprep.subr.mxu0 0.0
  %2079 = vmatpush2.msra.mxu0 0.0
  %2080 = vmatprep.subr.mxu0 0.0
  %2081 = vmatpush2.msra.mxu0 0.0
  %2082 = vmatprep.subr.mxu0 0.0
  %2083 = vmatpush2.msra.mxu0 0.0
  %2084 = vmatprep.subr.mxu0 0.0
  %2085 = vmatpush2.msra.mxu0 0.0
  %2086 = vmatprep.subr.mxu0 0.0
  %2087 = vmatpush2.msra.mxu0 0.0
  %2088 = vmatprep.subr.mxu0 0.0
  %2089 = vmatpush2.msra.mxu0 0.0
  %2090 = vmatprep.subr.mxu0 0.0
  %2091 = vmatpush2.msra.mxu0 0.0
  %2092 = vmatprep.subr.mxu0 0.0
  %2093 = vmatpush2.msra.mxu0 0.0
  %2094 = vmatprep.subr.mxu0 0.0
  %2095 = vmatpush2.msra.mxu0 0.0
  %2096 = vmatprep.subr.mxu0 0.0
  %2097 = vmatpush2.msra.mxu0 0.0
  %2098 = vmatprep.subr.mxu0 0.0
  %2099 = vmatpush2.msra.mxu0 0.0
  %2100 = vmatprep.subr.mxu0 0.0
  %2101 = vmatpush2.msra.mxu0 0.0
  %2102 = vmatprep.subr.mxu0 0.0
  %2103 = vmatpush2.msra.mxu0 0.0
  %2104 = vmatprep.mubr.f32.mxu0 0.0
  %2105 = vmatmul.mubr.f32.gmra.mxu0 %v2029
  %v2106 = vpop.f32.mrf.mxu0
  %v2107 = vadd.f32 0.0, %v2106
  %v2108 = vpop.f32.mrf.mxu0
  %2109 = vmatprep.mubr.f32.mxu0 0.0
  %2110 = vmatmul.mubr.f32.gmra.mxu0 %v2032
  %v2111 = vpop.f32.mrf.mxu0
  %v2112 = vadd.f32 0.0, %v2111
  %v2113 = vpop.f32.mrf.mxu0
  %2114 = vmatprep.mubr.f32.mxu0 0.0
  %2115 = vmatmul.mubr.f32.gmra.mxu0 %v2035
  %v2116 = vpop.f32.mrf.mxu0
  %v2117 = vadd.f32 0.0, %v2116
  %v2118 = vpop.f32.mrf.mxu0
  %2119 = vmatprep.mubr.f32.mxu0 0.0
  %2120 = vmatmul.mubr.f32.gmra.mxu0 %v2038
  %v2121 = vpop.f32.mrf.mxu0
  %v2122 = vadd.f32 0.0, %v2121
  %v2123 = vpop.f32.mrf.mxu0
  %2124 = vdwg.mxu0
  %v2125 = vadd.f32 %v975, %v2107
  %v2126 = vadd.f32 %v980, %v2112
  %v2127 = vadd.f32 %v1842, %v2117
  %v2128 = vadd.f32 %v1847, %v2122
  %v2129 = vmax.f32 %v2125, 0.0
  %v2130 = vmax.f32 %v2126, 0.0
  %v2131 = vmax.f32 %v2127, 0.0
  %v2132 = vmax.f32 %v2128, 0.0
  %2133 = vrot.lane.b32.xlu0 %v27, 64
  %v2134 = vpop.permute.xlu0 %2133
  %2135 = vrot.lane.b32.xlu0 %v28, 64
  %v2136 = vpop.permute.xlu0 %2135
  %2137 = vrot.lane.b32.xlu0 %v29, 64
  %v2138 = vpop.permute.xlu0 %2137
  %2139 = vrot.lane.b32.xlu0 %v30, 64
  %v2140 = vpop.permute.xlu0 %2139
  %2141 = vrot.lane.b32.xlu0 %v31, 64
  %v2142 = vpop.permute.xlu0 %2141
  %2143 = vrot.lane.b32.xlu0 %v32, 64
  %v2144 = vpop.permute.xlu0 %2143
  %2145 = vrot.lane.b32.xlu0 %v33, 64
  %v2146 = vpop.permute.xlu0 %2145
  %2147 = vrot.lane.b32.xlu0 %v34, 64
  %v2148 = vpop.permute.xlu0 %2147
  %vm2157 = vcmask 523264
  %v2159 = vsel %vm2157, %v2129, 0
  %v2162 = vsel %vm2157, %v2130, 0
  %v2165 = vsel %vm2157, %v2131, 0
  %v2168 = vsel %vm2157, %v2132, 0
  %2170 = vmatprep.subr.mxu0 0.0
  %2171 = vmatpush1.msra.mxu0 0.0
  %2172 = vmatprep.subr.mxu0 0.0
  %2173 = vmatpush1.msra.mxu0 0.0
  %2174 = vmatprep.subr.mxu0 0.0
  %2175 = vmatpush1.msra.mxu0 0.0
  %2176 = vmatprep.subr.mxu0 0.0
  %2177 = vmatpush1.msra.mxu0 0.0
  %2178 = vmatprep.subr.mxu0 0.0
  %2179 = vmatpush1.msra.mxu0 0.0
  %2180 = vmatprep.subr.mxu0 0.0
  %2181 = vmatpush1.msra.mxu0 0.0
  %2182 = vmatprep.subr.mxu0 0.0
  %2183 = vmatpush1.msra.mxu0 0.0
  %2184 = vmatprep.subr.mxu0 0.0
  %2185 = vmatpush1.msra.mxu0 0.0
  %2186 = vmatprep.subr.mxu0 0.0
  %2187 = vmatpush1.msra.mxu0 %v2148
  %2188 = vmatprep.subr.mxu0 0.0
  %2189 = vmatpush1.msra.mxu0 %v2146
  %2190 = vmatprep.subr.mxu0 0.0
  %2191 = vmatpush1.msra.mxu0 %v2144
  %2192 = vmatprep.subr.mxu0 0.0
  %2193 = vmatpush1.msra.mxu0 %v2142
  %2194 = vmatprep.subr.mxu0 0.0
  %2195 = vmatpush1.msra.mxu0 %v2140
  %2196 = vmatprep.subr.mxu0 0.0
  %2197 = vmatpush1.msra.mxu0 %v2138
  %2198 = vmatprep.subr.mxu0 0.0
  %2199 = vmatpush1.msra.mxu0 %v2136
  %2200 = vmatprep.subr.mxu0 0.0
  %2201 = vmatpush1.msra.mxu0 %v2134
  %2202 = vmatprep.subr.mxu0 0.0
  %2203 = vmatpush2.msra.mxu0 0.0
  %2204 = vmatprep.subr.mxu0 0.0
  %2205 = vmatpush2.msra.mxu0 0.0
  %2206 = vmatprep.subr.mxu0 0.0
  %2207 = vmatpush2.msra.mxu0 0.0
  %2208 = vmatprep.subr.mxu0 0.0
  %2209 = vmatpush2.msra.mxu0 0.0
  %2210 = vmatprep.subr.mxu0 0.0
  %2211 = vmatpush2.msra.mxu0 0.0
  %2212 = vmatprep.subr.mxu0 0.0
  %2213 = vmatpush2.msra.mxu0 0.0
  %2214 = vmatprep.subr.mxu0 0.0
  %2215 = vmatpush2.msra.mxu0 0.0
  %2216 = vmatprep.subr.mxu0 0.0
  %2217 = vmatpush2.msra.mxu0 0.0
  %2218 = vmatprep.subr.mxu0 0.0
  %2219 = vmatpush2.msra.mxu0 0.0
  %2220 = vmatprep.subr.mxu0 0.0
  %2221 = vmatpush2.msra.mxu0 0.0
  %2222 = vmatprep.subr.mxu0 0.0
  %2223 = vmatpush2.msra.mxu0 0.0
  %2224 = vmatprep.subr.mxu0 0.0
  %2225 = vmatpush2.msra.mxu0 0.0
  %2226 = vmatprep.subr.mxu0 0.0
  %2227 = vmatpush2.msra.mxu0 0.0
  %2228 = vmatprep.subr.mxu0 0.0
  %2229 = vmatpush2.msra.mxu0 0.0
  %2230 = vmatprep.subr.mxu0 0.0
  %2231 = vmatpush2.msra.mxu0 0.0
  %2232 = vmatprep.subr.mxu0 0.0
  %2233 = vmatpush2.msra.mxu0 0.0
  %2234 = vmatprep.mubr.f32.mxu0 0.0
  %2235 = vmatmul.mubr.f32.gmra.mxu0 %v2159
  %v2236 = vpop.f32.mrf.mxu0
  %v2237 = vadd.f32 0.0, %v2236
  %v2238 = vpop.f32.mrf.mxu0
  %2239 = vmatprep.mubr.f32.mxu0 0.0
  %2240 = vmatmul.mubr.f32.gmra.mxu0 %v2162
  %v2241 = vpop.f32.mrf.mxu0
  %v2242 = vadd.f32 0.0, %v2241
  %v2243 = vpop.f32.mrf.mxu0
  %2244 = vmatprep.mubr.f32.mxu0 0.0
  %2245 = vmatmul.mubr.f32.gmra.mxu0 %v2165
  %v2246 = vpop.f32.mrf.mxu0
  %v2247 = vadd.f32 0.0, %v2246
  %v2248 = vpop.f32.mrf.mxu0
  %2249 = vmatprep.mubr.f32.mxu0 0.0
  %2250 = vmatmul.mubr.f32.gmra.mxu0 %v2168
  %v2251 = vpop.f32.mrf.mxu0
  %v2252 = vadd.f32 0.0, %v2251
  %v2253 = vpop.f32.mrf.mxu0
  %2254 = vdwg.mxu0
  %v2255 = vsel %vm102, %v2237, 0.0
  %2256 = vadd.xlane.f32.xlu0 %v2255
  %v2257 = vpop.xlane.xlu0 %2256
  %v2258 = vsel %vm102, %v2242, 0.0
  %2259 = vadd.xlane.f32.xlu0 %v2258
  %v2260 = vpop.xlane.xlu0 %2259
  %v2261 = vsel %vm102, %v2247, 0.0
  %2262 = vadd.xlane.f32.xlu0 %v2261
  %v2263 = vpop.xlane.xlu0 %2262
  %v2264 = vsel %vm102, %v2252, 0.0
  %2265 = vadd.xlane.f32.xlu0 %v2264
  %v2266 = vpop.xlane.xlu0 %2265
  %v2267 = vmul.f32 %v2257, %v1971
  %v2268 = vmul.f32 %v2260, %v1971
  %v2269 = vmul.f32 %v2263, %v1971
  %v2270 = vmul.f32 %v2266, %v1971
  %v2271 = vsub.f32 %v2237, %v2267
  %v2272 = vsub.f32 %v2242, %v2268
  %v2273 = vsub.f32 %v2247, %v2269
  %v2274 = vsub.f32 %v2252, %v2270
  %v2275 = vmul.f32 %v2271, %v2271
  %v2276 = vmul.f32 %v2272, %v2272
  %v2277 = vmul.f32 %v2273, %v2273
  %v2278 = vmul.f32 %v2274, %v2274
  %v2279 = vsel %vm102, %v2275, 0.0
  %2280 = vadd.xlane.f32.xlu0 %v2279
  %v2281 = vpop.xlane.xlu0 %2280
  %v2282 = vsel %vm102, %v2276, 0.0
  %2283 = vadd.xlane.f32.xlu0 %v2282
  %v2284 = vpop.xlane.xlu0 %2283
  %v2285 = vsel %vm102, %v2277, 0.0
  %2286 = vadd.xlane.f32.xlu0 %v2285
  %v2287 = vpop.xlane.xlu0 %2286
  %v2288 = vsel %vm102, %v2278, 0.0
  %2289 = vadd.xlane.f32.xlu0 %v2288
  %v2290 = vpop.xlane.xlu0 %2289
  %v2291 = vmul.f32 %v2281, %v1971
  %v2292 = vmul.f32 %v2284, %v1971
  %v2293 = vmul.f32 %v2287, %v1971
  %v2294 = vmul.f32 %v2290, %v1971
  %v2295 = vadd.f32 %v2291, 1e-05
  %v2296 = vadd.f32 %v2292, 1e-05
  %v2297 = vadd.f32 %v2293, 1e-05
  %v2298 = vadd.f32 %v2294, 1e-05
  %v2299 = vrsqrt.pop %v2295
  %v2300 = vrsqrt.pop %v2296
  %v2301 = vrsqrt.pop %v2297
  %v2302 = vrsqrt.pop %v2298
  %v2303 = vmul.f32 %v2271, %v2299
  %v2304 = vmul.f32 %v2272, %v2300
  %v2305 = vmul.f32 %v2273, %v2301
  %v2306 = vmul.f32 %v2274, %v2302
  %v2307 = vlaneseq
  %v2308 = vshrl.u32 %v2307, 7
  %v2309 = vsub.s32 7, %v2308
  %v2310 = vrot.slane %v35, %v2309
  %v2311 = vmul.f32 %v2303, %v2310
  %v2312 = vmul.f32 %v2304, %v2310
  %v2313 = vmul.f32 %v2305, %v2310
  %v2314 = vmul.f32 %v2306, %v2310
  %v2315 = vlaneseq
  %v2316 = vshrl.u32 %v2315, 7
  %v2317 = vsub.s32 0, %v2316
  %v2318 = vrot.slane %v36, %v2317
  %v2319 = vadd.f32 %v2311, %v2318
  %v2320 = vadd.f32 %v2312, %v2318
  %v2321 = vadd.f32 %v2313, %v2318
  %v2322 = vadd.f32 %v2314, %v2318
  %2323 = vxpose.xlu0.b32.start [1/16] %v2319, 128
  %2324 = vxpose.xlu0.b32.cont [2/16] %v2320, 128
  %2325 = vxpose.xlu0.b32.cont [3/16] %v2321, 128
  %2326 = vxpose.xlu0.b32.cont [4/16] %v2322, 128
  %2327 = vxpose.xlu0.b32.cont [5/16] 0.0, 128
  %2328 = vxpose.xlu0.b32.cont [6/16] 0.0, 128
  %2329 = vxpose.xlu0.b32.cont [7/16] 0.0, 128
  %2330 = vxpose.xlu0.b32.cont [8/16] 0.0, 128
  %2331 = vxpose.xlu0.b32.cont [9/16] 0.0, 128
  %2332 = vxpose.xlu0.b32.cont [10/16] 0.0, 128
  %2333 = vxpose.xlu0.b32.cont [11/16] 0.0, 128
  %2334 = vxpose.xlu0.b32.cont [12/16] 0.0, 128
  %2335 = vxpose.xlu0.b32.cont [13/16] 0.0, 128
  %2336 = vxpose.xlu0.b32.cont [14/16] 0.0, 128
  %2337 = vxpose.xlu0.b32.cont [15/16] 0.0, 128
  %2338 = vxpose.xlu0.b32.end [16/16] 0.0, 128
  %v2339 = vpop.trf.xlu0
  %v2340 = vpop.trf.xlu0
  %v2341 = vpop.trf.xlu0
  %v2342 = vpop.trf.xlu0
  %v2343 = vpop.trf.xlu0
  %v2344 = vpop.trf.xlu0
  %v2345 = vpop.trf.xlu0
  %v2346 = vpop.trf.xlu0
  %v2347 = vpop.trf.xlu0
  %v2348 = vpop.trf.xlu0
  %v2349 = vpop.trf.xlu0
  %v2350 = vpop.trf.xlu0
  %v2351 = vpop.trf.xlu0
  %v2352 = vpop.trf.xlu0
  %v2353 = vpop.trf.xlu0
  %v2354 = vpop.trf.xlu0
  %vm2355 = vcmask 130048
  %2356 = vst.msk [vmem:[%s6] sm:$0xff] %vm2355, %v2339
  %2357 = vst.msk [vmem:[%s6 + $0x8] sm:$0xff] %vm2355, %v2340
  %2358 = vst.msk [vmem:[%s6 + $0x10] sm:$0xff] %vm2355, %v2341
  %2359 = vst.msk [vmem:[%s6 + $0x18] sm:$0xff] %vm2355, %v2342
  %2364 = vrot.lane.b32.xlu0 %v2339, 112
  %v2365 = vpop.permute.xlu0 %2364
  %2366 = vrot.lane.b32.xlu0 %v2340, 112
  %v2367 = vpop.permute.xlu0 %2366
  %2368 = vrot.lane.b32.xlu0 %v2341, 112
  %v2369 = vpop.permute.xlu0 %2368
  %2370 = vrot.lane.b32.xlu0 %v2342, 112
  %v2371 = vpop.permute.xlu0 %2370
  %s2376 = scalar_lea.vmem %s6, 32
  %2377 = vst.msk [vmem:[%s2376] sm:$0xff] %vm2355, %v2365
  %2378 = vst.msk [vmem:[%s2376 + $0x8] sm:$0xff] %vm2355, %v2367
  %2379 = vst.msk [vmem:[%s2376 + $0x10] sm:$0xff] %vm2355, %v2369
  %2380 = vst.msk [vmem:[%s2376 + $0x18] sm:$0xff] %vm2355, %v2371
  // Predicated region
  $region26: #{tpu_custom_call.1} parent=0 // pred_check
    _
  $region27: #{tpu_custom_call.1} parent=0 // pred_check_branch
    %2382 = sbr.rel (0) target = $region29
  $region28: #{tpu_custom_call.1} parent=0 // pred_region
    _
  $region29: #{tpu_custom_call.1} parent=0 // pred_fallthru
    _
  // Predicated region
  $region30: #{tpu_custom_call.1} parent=0 // pred_check
    _
  $region31: #{tpu_custom_call.1} parent=0 // pred_check_branch
    %2384 = sbr.rel (0) target = $region33
  $region32: #{tpu_custom_call.1} parent=0 // pred_region
    _
  $region33: #{tpu_custom_call.1} parent=0 // pred_fallthru
    _

</llo_original>
